<compile_context>
chip_gen: v6e
topology: v6e:2x2x1
jax: 0.10.0
libtpu: 0.0.40
codegen_flags: <defaults>
</compile_context>

<pallas_src>
import functools

import jax
import jax.numpy as jnp
from jax import lax
from jax.experimental import pallas as pl
from jax.experimental.pallas import tpu as pltpu

# dot_general dimension numbers.
_DN_NN = (((1,), (0,)), ((), ()))          # (c,d) @ (d,e)        -> (c,e)
_DN_TN = (((0,), (0,)), ((), ()))          # contract first dims  -> a.T @ b
_BDN_NT = (((2,), (2,)), ((0,), (0,)))     # (n,c,d) x (n,m,d)    -> (n,c,m)
_BDN_NN = (((2,), (1,)), ((0,), (0,)))     # (n,c,m) x (n,m,d)    -> (n,c,d)


def _delta_rule_kernel(q_ref, k_ref, v_ref, b_ref, init_ref,
                       o_ref, st_ref,
                       state_acc, w_buf, u_buf, a_buf,
                       *, cs, n_inner, use_bf16):
    """One grid step = n_inner consecutive delta-rule chunks of one (b, h).

    q_ref/k_ref/v_ref/b_ref : (n_inner*cs, D) tile
    init_ref                : (D, D) initial recurrent state for this bh
    o_ref                   : (n_inner*cs, D) output tile
    st_ref                  : (D, D) final-state output (written on last step)
    state_acc               : VMEM (D, D) f32 scratch (state across grid steps)
    w_buf/u_buf             : VMEM (rows, D) f32 staging for T@k_beta / T@v_beta
    a_buf                   : VMEM (rows, cs) f32 staging for tril(q@k^T)
    """
    c_idx = pl.program_id(1)

    @pl.when(c_idx == 0)
    def _():
        state_acc[...] = init_ref[...].astype(jnp.float32)

    D = q_ref.shape[-1]
    rows = n_inner * cs
    mm_dtype = jnp.bfloat16 if use_bf16 else jnp.float32

    # Hoisted triangular masks (loop invariant; JAX does not CSE broadcasts).
    row = lax.broadcasted_iota(jnp.int32, (cs, cs), 0)
    col = lax.broadcasted_iota(jnp.int32, (cs, cs), 1)
    strict_lower = col < row
    lower = col <= row
    eye_block = jnp.where(col == row, jnp.float32(1.0), jnp.float32(0.0))

    def _bmm(a, b, dims):
        # Batched matmuls: optionally bf16 operands, always f32 accumulation.
        return lax.dot_general(a.astype(mm_dtype), b.astype(mm_dtype), dims,
                               preferred_element_type=jnp.float32)

    # ---- Batched, state-independent precompute (5 of the 8 matmuls/chunk).
    # Streams the MXU across all n_inner chunks without per-chunk drains and
    # leaves only the serialized state-dependent chain in the loop below.
    q3 = jnp.clip(q_ref[...].astype(jnp.float32), -10000.0, 10000.0).reshape(
        n_inner, cs, D)
    k3 = jnp.clip(k_ref[...].astype(jnp.float32), -10000.0, 10000.0).reshape(
        n_inner, cs, D)
    v3 = jnp.clip(v_ref[...].astype(jnp.float32), -10000.0, 10000.0).reshape(
        n_inner, cs, D)
    b3 = jnp.clip(b_ref[...].astype(jnp.float32), 1e-06, 10000.0).reshape(
        n_inner, cs, D)

    k_beta = k3 * b3
    v_beta = v3 * b3

    # t = -(k_beta @ k^T).tril(-1) + I   (first-order form, as in PyTorch)
    kk = _bmm(k_beta, k3, _BDN_NT)                         # (n, cs, cs)
    t3 = jnp.where(strict_lower, -kk, eye_block)           # (n, cs, cs)
    w_buf[...] = _bmm(t3, k_beta, _BDN_NN).reshape(rows, D)
    u_buf[...] = _bmm(t3, v_beta, _BDN_NN).reshape(rows, D)
    qk = _bmm(q3, k3, _BDN_NT)                             # (n, cs, cs)
    a_buf[...] = jnp.where(lower, qk, jnp.float32(0.0)).reshape(rows, cs)

    # ---- Serialized state-dependent chain (4 matmuls per chunk).
    def body(i, state):
        start = i * cs
        if cs % 8 == 0:
            start = pl.multiple_of(start, 8)
        sl = pl.ds(start, cs)

        w_i = w_buf[sl, :]
        u_mat_i = u_buf[sl, :]
        a_i = a_buf[sl, :]
        # q/k re-read + clipped from the pipeline buffer (cheap VPU work that
        # hides under the MXU; avoids two more tile-sized staging buffers).
        q_i = jnp.clip(q_ref[sl, :].astype(jnp.float32), -10000.0, 10000.0)
        k_i = jnp.clip(k_ref[sl, :].astype(jnp.float32), -10000.0, 10000.0)

        # State recurrence kept in full f32 for accuracy.
        u_i = u_mat_i - lax.dot_general(w_i, state, _DN_NN,
                                        preferred_element_type=jnp.float32)
        # Output-only matmuls (do not feed the recurrence) may use bf16 operands.
        o_inter = lax.dot_general(q_i.astype(mm_dtype), state.astype(mm_dtype),
                                  _DN_NN, preferred_element_type=jnp.float32)
        o_intra = lax.dot_general(a_i.astype(mm_dtype), u_i.astype(mm_dtype),
                                  _DN_NN, preferred_element_type=jnp.float32)
        o_ref[sl, :] = (o_intra + o_inter).astype(o_ref.dtype)

        # new_state = state + k^T @ u_i (contraction over rows; no transposed copy)
        # TODO(synk): verify in the Mosaic dump that this _DN_TN contraction does
        # not emit a per-chunk vxpose through the XLU.
        return state + lax.dot_general(k_i, u_i, _DN_TN,
                                       preferred_element_type=jnp.float32)

    # unroll=2: enough ILP for the short chain without blowing the 64-vreg file.
    state = lax.fori_loop(0, n_inner, body, state_acc[...],
                          unroll=min(2, n_inner))
    state_acc[...] = state

    @pl.when(c_idx == pl.num_programs(1) - 1)
    def _():
        st_ref[...] = state_acc[...].astype(st_ref.dtype)


def _get_valid_chunk_size(seq_len, chunk_size):
    # Largest divisor of seq_len that is <= requested chunk_size.
    cs = min(chunk_size, seq_len)
    while seq_len % cs != 0:
        cs -= 1
    return cs


def _choose_inner_chunks(seq_len, cs, head_dim, max_block_rows=None):
    """Number of cs-sized chunks processed per grid step.

    Targets ~2048-4096 rows (or the whole sequence) per step so the fixed
    ~0.35us/step pipeline overhead and DMA setup are amortized, while keeping
    the total VMEM footprint (double-buffered pipeline tiles + staging scratch
    + batched intermediates) comfortably under the smallest per-core VMEM
    (v7x: 64 MiB/TC), and keeping the TPU (8, 128) second-to-last block-dim
    constraint satisfied."""
    num_chunks = seq_len // cs
    # f32 bytes of VMEM per block row: 2x5 pipeline copies + ~10 in-kernel
    # intermediates of width D, plus ~4 cs-wide square-matrix rows.
    per_row = 20 * head_dim * 4 + 4 * cs * 4
    budget_rows = max(cs, (36 << 20) // per_row)
    target_rows = min(4096, budget_rows)
    if max_block_rows is not None:
        target_rows = min(target_rows, max_block_rows)
    target = max(1, target_rows // cs)
    for n in range(min(target, num_chunks), 0, -1):
        if num_chunks % n:
            continue
        block = n * cs
        if block % 8 == 0 or block == seq_len:  # legal f32 tiling
            return n
    return num_chunks                            # block == seq_len always legal


def _bh_dimension_semantics(bh):
    """On v7x, CORE_PARALLEL actually shards the BH axis across the 2
    TensorCores; plain parallel/arbitrary have near-zero codegen impact on
    single-TC chips (v5e/v6e)."""
    try:
        kind = jax.devices()[0].device_kind.lower()
    except Exception:
        kind = ""
    if "v7" in kind and bh % 2 == 0:
        return pltpu.CORE_PARALLEL
    return pltpu.PARALLEL


@functools.partial(jax.jit,
                   static_argnames=("chunk_size", "n_inner", "use_bf16"))
def _delta_rule_pallas(q, k, v, beta, initial_state, *, chunk_size, n_inner,
                       use_bf16):
    BH, S, D = q.shape
    block_rows = n_inner * chunk_size
    grid = (BH, S // block_rows)

    # Leading size-1 dim squeezed -> kernel refs are (block_rows, D) / (D, D).
    tile_spec = pl.BlockSpec((None, block_rows, D), lambda bh, c: (bh, c, 0))
    state_spec = pl.BlockSpec((None, D, D), lambda bh, c: (bh, 0, 0))

    kernel = functools.partial(_delta_rule_kernel, cs=chunk_size,
                               n_inner=n_inner, use_bf16=use_bf16)

    # Explicit scoped-VMEM limit sized from the actual footprint (+ headroom),
    # capped at v7x's 64 MiB physical per-TC VMEM.
    tile_bytes = block_rows * D * 4
    sq_bytes = block_rows * chunk_size * 4
    vmem_est = (10 * tile_bytes                 # 4 in + 1 out, double-buffered
                + 2 * tile_bytes + sq_bytes     # w/u/a staging scratch
                + 10 * tile_bytes + 3 * sq_bytes  # batched precompute values
                + 8 * D * D * 4                 # state tiles + scratch
                + (4 << 20))                    # headroom
    vmem_limit = int(min(max(vmem_est, 32 << 20), 64 << 20))

    out, final_state = pl.pallas_call(
        kernel,
        out_shape=(
            jax.ShapeDtypeStruct((BH, S, D), q.dtype),
            jax.ShapeDtypeStruct((BH, D, D), q.dtype),
        ),
        grid_spec=pltpu.PrefetchScalarGridSpec(
            num_scalar_prefetch=0,
            grid=grid,
            in_specs=[tile_spec, tile_spec, tile_spec, tile_spec, state_spec],
            out_specs=[tile_spec, state_spec],
            scratch_shapes=[
                pltpu.VMEM((D, D), jnp.float32),
                pltpu.VMEM((block_rows, D), jnp.float32),
                pltpu.VMEM((block_rows, D), jnp.float32),
                pltpu.VMEM((block_rows, chunk_size), jnp.float32),
            ],
        ),
        compiler_params=pltpu.CompilerParams(
            dimension_semantics=(_bh_dimension_semantics(BH), pltpu.ARBITRARY),
            vmem_limit_bytes=vmem_limit,
        ),
    )(q, k, v, beta, initial_state)
    return out, final_state


class AttentionOperator:
    """JAX/Pallas port of the PyTorch AttentionOperator (delta_rule mode)."""

    def __init__(self, mode="delta_rule"):
        self.mode = mode

    def __call__(self, q, k, v, **options):
        beta = options.get("beta", None)
        chunk_size = options.get("chunk_size", 64)
        recurrent_state = options.get("recurrent_state", None)
        use_bf16 = options.get("use_bf16_matmul", False)
        max_block_rows = options.get("max_block_rows", None)
        if self.mode == "delta_rule":
            return self.chunk_delta_rule_forward(
                q, k, v, beta, chunk_size, initial_state=recurrent_state,
                use_bf16_matmul=use_bf16, max_block_rows=max_block_rows)
        if self.mode == "gla":
            # TODO(synk): GLA path depends on fused_chunk_gla/fused_recurrent_gla
            # CUDA kernels which are unavailable; not implemented here.
            raise RuntimeError("GLA kernels are not available.")
        raise ValueError(f"Unknown operator mode: {self.mode}")

    @staticmethod
    def chunk_delta_rule_forward(query, key, value, beta, chunk_size,
                                 initial_state=None, use_bf16_matmul=False,
                                 max_block_rows=None):
        B, H, S, D = query.shape
        cs = _get_valid_chunk_size(S, chunk_size)
        n_inner = _choose_inner_chunks(S, cs, D, max_block_rows)

        qf = query.reshape(B * H, S, D)
        kf = key.reshape(B * H, S, D)
        vf = value.reshape(B * H, S, D)
        bf = beta.reshape(B * H, S, D)
        if initial_state is None:
            st0 = jnp.zeros((B * H, D, D), dtype=query.dtype)
        else:
            st0 = initial_state.reshape(B * H, D, D)

        out, state = _delta_rule_pallas(qf, kf, vf, bf, st0,
                                        chunk_size=cs, n_inner=n_inner,
                                        use_bf16=use_bf16_matmul)
        return out.reshape(B, H, S, D), state.reshape(B, H, D, D)


# ---------------------------------------------------------------------------
# Pure-JAX reference (mirrors the PyTorch code) for a correctness check.
# ---------------------------------------------------------------------------
def _reference_delta_rule(query, key, value, beta, chunk_size, initial_state=None):
    B, H, S, D = query.shape
    cs = _get_valid_chunk_size(S, chunk_size)
    nc = S // cs
    qc = query.reshape(B, H, nc, cs, D)
    kc = key.reshape(B, H, nc, cs, D)
    vc = value.reshape(B, H, nc, cs, D)
    bc = beta.reshape(B, H, nc, cs, D)
    state = (jnp.zeros((B, H, D, D), query.dtype)
             if initial_state is None else initial_state)
    eye = jnp.eye(cs, dtype=query.dtype)[None, None]
    outs = []
    for ci in range(nc):
        q = jnp.clip(qc[:, :, ci], -10000.0, 10000.0)
        k = jnp.clip(kc[:, :, ci], -10000.0, 10000.0)
        v = jnp.clip(vc[:, :, ci], -10000.0, 10000.0)
        b = jnp.clip(bc[:, :, ci], 1e-06, 10000.0)
        k_beta = k * b
        v_beta = v * b
        t = -jnp.tril(k_beta @ jnp.swapaxes(k, -2, -1), k=-1) + eye
        w = t @ k_beta
        u = t @ v_beta
        u_i = u - w @ state
        o_inter = q @ state
        a_i = jnp.tril(q @ jnp.swapaxes(k, -2, -1))
        o_intra = a_i @ u_i
        state = state + jnp.swapaxes(k, -2, -1) @ u_i
        outs.append(o_intra + o_inter)
    out = jnp.stack(outs, axis=2).reshape(B, H, S, D)
    return out, state


if __name__ == "__main__":
    op = AttentionOperator(mode="delta_rule")

    # ---- Test 1: small shapes, default f32 precision (matches PyTorch) ----
    B, H, S, D = 2, 2, 16, 32
    chunk_size = 8
    key0 = jax.random.PRNGKey(0)
    kq, kk_, kv, kb = jax.random.split(key0, 4)
    q = jax.random.normal(kq, (B, H, S, D), dtype=jnp.float32)
    k = jax.random.normal(kk_, (B, H, S, D), dtype=jnp.float32)
    v = jax.random.normal(kv, (B, H, S, D), dtype=jnp.float32)
    beta = jax.nn.sigmoid(jax.random.normal(kb, (B, H, S, D), dtype=jnp.float32))

    out, final_state = op(q, k, v, beta=beta, chunk_size=chunk_size)
    out = jax.block_until_ready(out)
    final_state = jax.block_until_ready(final_state)

    ref_out, ref_state = _reference_delta_rule(q, k, v, beta, chunk_size)
    assert out.shape == (B, H, S, D) and final_state.shape == (B, H, D, D)
    assert jnp.allclose(out, ref_out, atol=1e-3, rtol=1e-3)
    assert jnp.allclose(final_state, ref_state, atol=1e-3, rtol=1e-3)

    # Optional bf16-MXU-operand fast path (f32 accumulation, f32 state chain).
    # Opt-in and intentionally loosely checked: element-wise tolerances are
    # not meaningful for bf16 with cancellation, so use a relative-norm check.
    out_bf, _ = op(q, k, v, beta=beta, chunk_size=chunk_size,
                   use_bf16_matmul=True)
    out_bf = jax.block_until_ready(out_bf)
    rel = (jnp.linalg.norm((out_bf - ref_out).ravel())
           / (jnp.linalg.norm(ref_out.ravel()) + 1e-30))
    assert float(rel) < 0.1, f"bf16 fast-path relative error too large: {float(rel)}"

    # ---- Test 2: longer sequence exercising the inner multi-chunk loop AND
    # ---- multi-grid-step state carry, with an explicit initial state ------
    B2, H2, S2, D2 = 1, 2, 1024, 64
    cs2 = 64
    k1, k2, k3, k4, k5 = jax.random.split(jax.random.PRNGKey(1), 5)
    scale = 1.0 / jnp.sqrt(jnp.float32(D2))
    q2 = jax.random.normal(k1, (B2, H2, S2, D2), dtype=jnp.float32) * scale
    k2_ = jax.random.normal(k2, (B2, H2, S2, D2), dtype=jnp.float32) * scale
    v2 = jax.random.normal(k3, (B2, H2, S2, D2), dtype=jnp.float32) * scale
    b2 = jax.nn.sigmoid(jax.random.normal(k4, (B2, H2, S2, D2), dtype=jnp.float32))
    s0 = jax.random.normal(k5, (B2, H2, D2, D2), dtype=jnp.float32) * 0.1

    # max_block_rows=256 -> 4 chunks per grid step, 4 grid steps per (b, h):
    # exercises both the fused inner loop and the cross-step state scratch.
    out2, st2 = op(q2, k2_, v2, beta=b2, chunk_size=cs2, recurrent_state=s0,
                   max_block_rows=256)
    out2 = jax.block_until_ready(out2)
    st2 = jax.block_until_ready(st2)
    ref_out2, ref_st2 = _reference_delta_rule(q2, k2_, v2, b2, cs2,
                                              initial_state=s0)
    assert jnp.allclose(out2, ref_out2, atol=2e-3, rtol=2e-3)
    assert jnp.allclose(st2, ref_st2, atol=2e-3, rtol=2e-3)

    print("KERNEL_OK")
</pallas_src>

<mosaic_0001>
module attributes {stable_mosaic.version = 11 : i64} {
  func.func @_delta_rule_kernel(%arg0: i32, %arg1: i32, %arg2: memref<1x16x32xf32, #tpu.memory_space<vmem>>, %arg3: memref<1x16x32xf32, #tpu.memory_space<vmem>>, %arg4: memref<1x16x32xf32, #tpu.memory_space<vmem>>, %arg5: memref<1x16x32xf32, #tpu.memory_space<vmem>>, %arg6: memref<1x32x32xf32, #tpu.memory_space<vmem>>, %arg7: memref<1x16x32xf32, #tpu.memory_space<vmem>>, %arg8: memref<1x32x32xf32, #tpu.memory_space<vmem>>, %arg9: memref<32x32xf32, #tpu.memory_space<vmem>>, %arg10: memref<16x32xf32, #tpu.memory_space<vmem>>, %arg11: memref<16x32xf32, #tpu.memory_space<vmem>>, %arg12: memref<16x8xf32, #tpu.memory_space<vmem>>) attributes {dimension_semantics = [#tpu.dimension_semantics<parallel>, #tpu.dimension_semantics<arbitrary>], iteration_bounds = array<i64: 4, 1>, scalar_prefetch = 0 : i64, scratch_operands = 4 : i64, tpu.core_type = #tpu.core_type<tc>, window_params = [{transform_indices = @transform_0, window_bounds = array<i64: 1, 16, 32>}, {transform_indices = @transform_1, window_bounds = array<i64: 1, 16, 32>}, {transform_indices = @transform_2, window_bounds = array<i64: 1, 16, 32>}, {transform_indices = @transform_3, window_bounds = array<i64: 1, 16, 32>}, {transform_indices = @transform_4, window_bounds = array<i64: 1, 32, 32>}, {transform_indices = @transform_5, window_bounds = array<i64: 1, 16, 32>}, {transform_indices = @transform_6, window_bounds = array<i64: 1, 32, 32>}]} {
    %c0_i32 = arith.constant 0 : i32
    %0 = arith.cmpi eq, %arg1, %c0_i32 : i32
    %1 = arith.extui %0 : i1 to i32
    %c0_i32_0 = arith.constant 0 : i32
    %2 = arith.cmpi ne, %1, %c0_i32_0 : i32
    scf.if %2 {
      %c0_75 = arith.constant 0 : index
      %c0_76 = arith.constant 0 : index
      %c0_77 = arith.constant 0 : index
      %133 = vector.load %arg6[%c0_75, %c0_76, %c0_77] : memref<1x32x32xf32, #tpu.memory_space<vmem>>, vector<1x32x32xf32>
      %134 = vector.shape_cast %133 : vector<1x32x32xf32> to vector<32x32xf32>
      %c0_78 = arith.constant 0 : index
      %c0_79 = arith.constant 0 : index
      %135 = vector.load %arg9[%c0_78, %c0_79] : memref<32x32xf32, #tpu.memory_space<vmem>>, vector<32x32xf32>
      tpu.vector_store %arg9[%c0_78, %c0_79], %134 {strides = array<i32>} : memref<32x32xf32, #tpu.memory_space<vmem>>, vector<32x32xf32>,
    } else {
    }
    %3 = tpu.iota {dimensions = array<i32: 0>} : vector<8x8xi32>
    %4 = tpu.iota {dimensions = array<i32: 1>} : vector<8x8xi32>
    %5 = arith.cmpi slt, %4, %3 : vector<8x8xi32>
    %6 = arith.cmpi sle, %4, %3 : vector<8x8xi32>
    %7 = arith.cmpi eq, %4, %3 : vector<8x8xi32>
    %cst = arith.constant 1.000000e+00 : f32
    %cst_1 = arith.constant 0.000000e+00 : f32
    %8 = vector.broadcast %cst : f32 to vector<8x8xf32>
    %9 = vector.broadcast %cst_1 : f32 to vector<8x8xf32>
    %10 = arith.select %7, %8, %9 : vector<8x8xi1>, vector<8x8xf32>
    %c0 = arith.constant 0 : index
    %c0_2 = arith.constant 0 : index
    %c0_3 = arith.constant 0 : index
    %11 = vector.load %arg2[%c0, %c0_2, %c0_3] : memref<1x16x32xf32, #tpu.memory_space<vmem>>, vector<1x16x32xf32>
    %12 = vector.shape_cast %11 : vector<1x16x32xf32> to vector<16x32xf32>
    %cst_4 = arith.constant -1.000000e+04 : f32
    %cst_5 = arith.constant 1.000000e+04 : f32
    %13 = vector.broadcast %cst_4 : f32 to vector<16x32xf32>
    %14 = arith.maximumf %13, %12 : vector<16x32xf32>
    %15 = vector.broadcast %cst_5 : f32 to vector<16x32xf32>
    %16 = arith.minimumf %15, %14 : vector<16x32xf32>
    %17 = vector.shape_cast %16 : vector<16x32xf32> to vector<2x8x32xf32>
    %c0_6 = arith.constant 0 : index
    %c0_7 = arith.constant 0 : index
    %c0_8 = arith.constant 0 : index
    %18 = vector.load %arg3[%c0_6, %c0_7, %c0_8] : memref<1x16x32xf32, #tpu.memory_space<vmem>>, vector<1x16x32xf32>
    %19 = vector.shape_cast %18 : vector<1x16x32xf32> to vector<16x32xf32>
    %cst_9 = arith.constant -1.000000e+04 : f32
    %cst_10 = arith.constant 1.000000e+04 : f32
    %20 = vector.broadcast %cst_9 : f32 to vector<16x32xf32>
    %21 = arith.maximumf %20, %19 : vector<16x32xf32>
    %22 = vector.broadcast %cst_10 : f32 to vector<16x32xf32>
    %23 = arith.minimumf %22, %21 : vector<16x32xf32>
    %24 = vector.shape_cast %23 : vector<16x32xf32> to vector<2x8x32xf32>
    %c0_11 = arith.constant 0 : index
    %c0_12 = arith.constant 0 : index
    %c0_13 = arith.constant 0 : index
    %25 = vector.load %arg4[%c0_11, %c0_12, %c0_13] : memref<1x16x32xf32, #tpu.memory_space<vmem>>, vector<1x16x32xf32>
    %26 = vector.shape_cast %25 : vector<1x16x32xf32> to vector<16x32xf32>
    %cst_14 = arith.constant -1.000000e+04 : f32
    %cst_15 = arith.constant 1.000000e+04 : f32
    %27 = vector.broadcast %cst_14 : f32 to vector<16x32xf32>
    %28 = arith.maximumf %27, %26 : vector<16x32xf32>
    %29 = vector.broadcast %cst_15 : f32 to vector<16x32xf32>
    %30 = arith.minimumf %29, %28 : vector<16x32xf32>
    %31 = vector.shape_cast %30 : vector<16x32xf32> to vector<2x8x32xf32>
    %c0_16 = arith.constant 0 : index
    %c0_17 = arith.constant 0 : index
    %c0_18 = arith.constant 0 : index
    %32 = vector.load %arg5[%c0_16, %c0_17, %c0_18] : memref<1x16x32xf32, #tpu.memory_space<vmem>>, vector<1x16x32xf32>
    %33 = vector.shape_cast %32 : vector<1x16x32xf32> to vector<16x32xf32>
    %cst_19 = arith.constant 9.99999997E-7 : f32
    %cst_20 = arith.constant 1.000000e+04 : f32
    %34 = vector.broadcast %cst_19 : f32 to vector<16x32xf32>
    %35 = arith.maximumf %34, %33 : vector<16x32xf32>
    %36 = vector.broadcast %cst_20 : f32 to vector<16x32xf32>
    %37 = arith.minimumf %36, %35 : vector<16x32xf32>
    %38 = vector.shape_cast %37 : vector<16x32xf32> to vector<2x8x32xf32>
    %39 = arith.mulf %24, %38 : vector<2x8x32xf32>
    %40 = arith.mulf %31, %38 : vector<2x8x32xf32>
    %cst_21 = arith.constant dense<0.000000e+00> : vector<2x8x8xf32>
    %41 = tpu.matmul %39, %24, %cst_21 {dimension_numbers = #tpu.dot_dimension_numbers<[2], [2], [1], [1], [0, 0, 0, 1, 1, 1], [0], [0]>} : vector<2x8x32xf32>, vector<2x8x32xf32>, vector<2x8x8xf32> -> vector<2x8x8xf32>
    %cst_22 = arith.constant 0.000000e+00 : f32
    %42 = vector.broadcast %cst_22 : f32 to vector<2x8x8xf32>
    %43 = arith.subf %42, %41 : vector<2x8x8xf32>
    %44 = vector.shape_cast %5 : vector<8x8xi1> to vector<1x8x8xi1>
    %45 = vector.broadcast %44 : vector<1x8x8xi1> to vector<2x8x8xi1>
    %46 = vector.shape_cast %10 : vector<8x8xf32> to vector<1x8x8xf32>
    %47 = vector.broadcast %46 : vector<1x8x8xf32> to vector<2x8x8xf32>
    %48 = arith.select %45, %43, %47 : vector<2x8x8xi1>, vector<2x8x8xf32>
    %cst_23 = arith.constant dense<0.000000e+00> : vector<2x8x32xf32>
    %49 = tpu.matmul %48, %39, %cst_23 {dimension_numbers = #tpu.dot_dimension_numbers<[2], [1], [1], [2], [0, 0, 0, 1, 1, 2], [0], [0]>} : vector<2x8x8xf32>, vector<2x8x32xf32>, vector<2x8x32xf32> -> vector<2x8x32xf32>
    %50 = vector.shape_cast %49 : vector<2x8x32xf32> to vector<16x32xf32>
    %c0_24 = arith.constant 0 : index
    %c0_25 = arith.constant 0 : index
    %51 = vector.load %arg10[%c0_24, %c0_25] : memref<16x32xf32, #tpu.memory_space<vmem>>, vector<16x32xf32>
    tpu.vector_store %arg10[%c0_24, %c0_25], %50 {strides = array<i32>} : memref<16x32xf32, #tpu.memory_space<vmem>>, vector<16x32xf32>,
    %cst_26 = arith.constant dense<0.000000e+00> : vector<2x8x32xf32>
    %52 = tpu.matmul %48, %40, %cst_26 {dimension_numbers = #tpu.dot_dimension_numbers<[2], [1], [1], [2], [0, 0, 0, 1, 1, 2], [0], [0]>} : vector<2x8x8xf32>, vector<2x8x32xf32>, vector<2x8x32xf32> -> vector<2x8x32xf32>
    %53 = vector.shape_cast %52 : vector<2x8x32xf32> to vector<16x32xf32>
    %c0_27 = arith.constant 0 : index
    %c0_28 = arith.constant 0 : index
    %54 = vector.load %arg11[%c0_27, %c0_28] : memref<16x32xf32, #tpu.memory_space<vmem>>, vector<16x32xf32>
    tpu.vector_store %arg11[%c0_27, %c0_28], %53 {strides = array<i32>} : memref<16x32xf32, #tpu.memory_space<vmem>>, vector<16x32xf32>,
    %cst_29 = arith.constant dense<0.000000e+00> : vector<2x8x8xf32>
    %55 = tpu.matmul %17, %24, %cst_29 {dimension_numbers = #tpu.dot_dimension_numbers<[2], [2], [1], [1], [0, 0, 0, 1, 1, 1], [0], [0]>} : vector<2x8x32xf32>, vector<2x8x32xf32>, vector<2x8x8xf32> -> vector<2x8x8xf32>
    %cst_30 = arith.constant 0.000000e+00 : f32
    %56 = vector.shape_cast %6 : vector<8x8xi1> to vector<1x8x8xi1>
    %57 = vector.broadcast %56 : vector<1x8x8xi1> to vector<2x8x8xi1>
    %58 = vector.broadcast %cst_30 : f32 to vector<2x8x8xf32>
    %59 = arith.select %57, %55, %58 : vector<2x8x8xi1>, vector<2x8x8xf32>
    %60 = vector.shape_cast %59 : vector<2x8x8xf32> to vector<16x8xf32>
    %c0_31 = arith.constant 0 : index
    %c0_32 = arith.constant 0 : index
    %61 = vector.load %arg12[%c0_31, %c0_32] : memref<16x8xf32, #tpu.memory_space<vmem>>, vector<16x8xf32>
    tpu.vector_store %arg12[%c0_31, %c0_32], %60 {strides = array<i32>} : memref<16x8xf32, #tpu.memory_space<vmem>>, vector<16x8xf32>,
    %c0_33 = arith.constant 0 : index
    %c0_34 = arith.constant 0 : index
    %62 = vector.load %arg9[%c0_33, %c0_34] : memref<32x32xf32, #tpu.memory_space<vmem>>, vector<32x32xf32>
    %c0_i32_35 = arith.constant 0 : i32
    %c8_i32 = arith.constant 8 : i32
    %63 = arith.muli %c0_i32_35, %c8_i32 : i32
    %64 = tpu.assume_multiple %63, 8 : i32
    %65 = arith.index_cast %64 : i32 to index
    %c0_36 = arith.constant 0 : index
    %66 = vector.load %arg10[%65, %c0_36] : memref<16x32xf32, #tpu.memory_space<vmem>>, vector<8x32xf32>
    %67 = arith.index_cast %64 : i32 to index
    %c0_37 = arith.constant 0 : index
    %68 = vector.load %arg11[%67, %c0_37] : memref<16x32xf32, #tpu.memory_space<vmem>>, vector<8x32xf32>
    %69 = arith.index_cast %64 : i32 to index
    %c0_38 = arith.constant 0 : index
    %70 = vector.load %arg12[%69, %c0_38] : memref<16x8xf32, #tpu.memory_space<vmem>>, vector<8x8xf32>
    %c0_39 = arith.constant 0 : index
    %71 = arith.index_cast %64 : i32 to index
    %c0_40 = arith.constant 0 : index
    %72 = vector.load %arg2[%c0_39, %71, %c0_40] : memref<1x16x32xf32, #tpu.memory_space<vmem>>, vector<1x8x32xf32>
    %73 = vector.shape_cast %72 : vector<1x8x32xf32> to vector<8x32xf32>
    %cst_41 = arith.constant -1.000000e+04 : f32
    %cst_42 = arith.constant 1.000000e+04 : f32
    %74 = vector.broadcast %cst_41 : f32 to vector<8x32xf32>
    %75 = arith.maximumf %74, %73 : vector<8x32xf32>
    %76 = vector.broadcast %cst_42 : f32 to vector<8x32xf32>
    %77 = arith.minimumf %76, %75 : vector<8x32xf32>
    %c0_43 = arith.constant 0 : index
    %78 = arith.index_cast %64 : i32 to index
    %c0_44 = arith.constant 0 : index
    %79 = vector.load %arg3[%c0_43, %78, %c0_44] : memref<1x16x32xf32, #tpu.memory_space<vmem>>, vector<1x8x32xf32>
    %80 = vector.shape_cast %79 : vector<1x8x32xf32> to vector<8x32xf32>
    %cst_45 = arith.constant -1.000000e+04 : f32
    %cst_46 = arith.constant 1.000000e+04 : f32
    %81 = vector.broadcast %cst_45 : f32 to vector<8x32xf32>
    %82 = arith.maximumf %81, %80 : vector<8x32xf32>
    %83 = vector.broadcast %cst_46 : f32 to vector<8x32xf32>
    %84 = arith.minimumf %83, %82 : vector<8x32xf32>
    %cst_47 = arith.constant dense<0.000000e+00> : vector<8x32xf32>
    %85 = tpu.matmul %66, %62, %cst_47 {dimension_numbers = #tpu.dot_dimension_numbers<[1], [0], [0], [1], [0, 0, 1, 1], [], []>} : vector<8x32xf32>, vector<32x32xf32>, vector<8x32xf32> -> vector<8x32xf32>
    %86 = arith.subf %68, %85 : vector<8x32xf32>
    %cst_48 = arith.constant dense<0.000000e+00> : vector<8x32xf32>
    %87 = tpu.matmul %77, %62, %cst_48 {dimension_numbers = #tpu.dot_dimension_numbers<[1], [0], [0], [1], [0, 0, 1, 1], [], []>} : vector<8x32xf32>, vector<32x32xf32>, vector<8x32xf32> -> vector<8x32xf32>
    %cst_49 = arith.constant dense<0.000000e+00> : vector<8x32xf32>
    %88 = tpu.matmul %70, %86, %cst_49 {dimension_numbers = #tpu.dot_dimension_numbers<[1], [0], [0], [1], [0, 0, 1, 1], [], []>} : vector<8x8xf32>, vector<8x32xf32>, vector<8x32xf32> -> vector<8x32xf32>
    %89 = arith.addf %88, %87 : vector<8x32xf32>
    %c0_50 = arith.constant 0 : index
    %90 = arith.index_cast %64 : i32 to index
    %c0_51 = arith.constant 0 : index
    %91 = vector.load %arg7[%c0_50, %90, %c0_51] : memref<1x16x32xf32, #tpu.memory_space<vmem>>, vector<1x8x32xf32>
    %92 = vector.shape_cast %91 : vector<1x8x32xf32> to vector<8x32xf32>
    %93 = vector.shape_cast %89 : vector<8x32xf32> to vector<1x8x32xf32>
    tpu.vector_store %arg7[%c0_50, %90, %c0_51], %93 {strides = array<i32>} : memref<1x16x32xf32, #tpu.memory_space<vmem>>, vector<1x8x32xf32>,
    %cst_52 = arith.constant dense<0.000000e+00> : vector<32x32xf32>
    %94 = tpu.matmul %84, %86, %cst_52 {dimension_numbers = #tpu.dot_dimension_numbers<[0], [0], [1], [1], [0, 1, 1, 1], [], []>} : vector<8x32xf32>, vector<8x32xf32>, vector<32x32xf32> -> vector<32x32xf32>
    %95 = arith.addf %62, %94 : vector<32x32xf32>
    %c1_i32 = arith.constant 1 : i32
    %c8_i32_53 = arith.constant 8 : i32
    %96 = arith.muli %c1_i32, %c8_i32_53 : i32
    %97 = tpu.assume_multiple %96, 8 : i32
    %98 = arith.index_cast %97 : i32 to index
    %c0_54 = arith.constant 0 : index
    %99 = vector.load %arg10[%98, %c0_54] : memref<16x32xf32, #tpu.memory_space<vmem>>, vector<8x32xf32>
    %100 = arith.index_cast %97 : i32 to index
    %c0_55 = arith.constant 0 : index
    %101 = vector.load %arg11[%100, %c0_55] : memref<16x32xf32, #tpu.memory_space<vmem>>, vector<8x32xf32>
    %102 = arith.index_cast %97 : i32 to index
    %c0_56 = arith.constant 0 : index
    %103 = vector.load %arg12[%102, %c0_56] : memref<16x8xf32, #tpu.memory_space<vmem>>, vector<8x8xf32>
    %c0_57 = arith.constant 0 : index
    %104 = arith.index_cast %97 : i32 to index
    %c0_58 = arith.constant 0 : index
    %105 = vector.load %arg2[%c0_57, %104, %c0_58] : memref<1x16x32xf32, #tpu.memory_space<vmem>>, vector<1x8x32xf32>
    %106 = vector.shape_cast %105 : vector<1x8x32xf32> to vector<8x32xf32>
    %cst_59 = arith.constant -1.000000e+04 : f32
    %cst_60 = arith.constant 1.000000e+04 : f32
    %107 = vector.broadcast %cst_59 : f32 to vector<8x32xf32>
    %108 = arith.maximumf %107, %106 : vector<8x32xf32>
    %109 = vector.broadcast %cst_60 : f32 to vector<8x32xf32>
    %110 = arith.minimumf %109, %108 : vector<8x32xf32>
    %c0_61 = arith.constant 0 : index
    %111 = arith.index_cast %97 : i32 to index
    %c0_62 = arith.constant 0 : index
    %112 = vector.load %arg3[%c0_61, %111, %c0_62] : memref<1x16x32xf32, #tpu.memory_space<vmem>>, vector<1x8x32xf32>
    %113 = vector.shape_cast %112 : vector<1x8x32xf32> to vector<8x32xf32>
    %cst_63 = arith.constant -1.000000e+04 : f32
    %cst_64 = arith.constant 1.000000e+04 : f32
    %114 = vector.broadcast %cst_63 : f32 to vector<8x32xf32>
    %115 = arith.maximumf %114, %113 : vector<8x32xf32>
    %116 = vector.broadcast %cst_64 : f32 to vector<8x32xf32>
    %117 = arith.minimumf %116, %115 : vector<8x32xf32>
    %cst_65 = arith.constant dense<0.000000e+00> : vector<8x32xf32>
    %118 = tpu.matmul %99, %95, %cst_65 {dimension_numbers = #tpu.dot_dimension_numbers<[1], [0], [0], [1], [0, 0, 1, 1], [], []>} : vector<8x32xf32>, vector<32x32xf32>, vector<8x32xf32> -> vector<8x32xf32>
    %119 = arith.subf %101, %118 : vector<8x32xf32>
    %cst_66 = arith.constant dense<0.000000e+00> : vector<8x32xf32>
    %120 = tpu.matmul %110, %95, %cst_66 {dimension_numbers = #tpu.dot_dimension_numbers<[1], [0], [0], [1], [0, 0, 1, 1], [], []>} : vector<8x32xf32>, vector<32x32xf32>, vector<8x32xf32> -> vector<8x32xf32>
    %cst_67 = arith.constant dense<0.000000e+00> : vector<8x32xf32>
    %121 = tpu.matmul %103, %119, %cst_67 {dimension_numbers = #tpu.dot_dimension_numbers<[1], [0], [0], [1], [0, 0, 1, 1], [], []>} : vector<8x8xf32>, vector<8x32xf32>, vector<8x32xf32> -> vector<8x32xf32>
    %122 = arith.addf %121, %120 : vector<8x32xf32>
    %c0_68 = arith.constant 0 : index
    %123 = arith.index_cast %97 : i32 to index
    %c0_69 = arith.constant 0 : index
    %124 = vector.load %arg7[%c0_68, %123, %c0_69] : memref<1x16x32xf32, #tpu.memory_space<vmem>>, vector<1x8x32xf32>
    %125 = vector.shape_cast %124 : vector<1x8x32xf32> to vector<8x32xf32>
    %126 = vector.shape_cast %122 : vector<8x32xf32> to vector<1x8x32xf32>
    tpu.vector_store %arg7[%c0_68, %123, %c0_69], %126 {strides = array<i32>} : memref<1x16x32xf32, #tpu.memory_space<vmem>>, vector<1x8x32xf32>,
    %cst_70 = arith.constant dense<0.000000e+00> : vector<32x32xf32>
    %127 = tpu.matmul %117, %119, %cst_70 {dimension_numbers = #tpu.dot_dimension_numbers<[0], [0], [1], [1], [0, 1, 1, 1], [], []>} : vector<8x32xf32>, vector<8x32xf32>, vector<32x32xf32> -> vector<32x32xf32>
    %128 = arith.addf %95, %127 : vector<32x32xf32>
    %c2_i32 = arith.constant 2 : i32
    %c0_71 = arith.constant 0 : index
    %c0_72 = arith.constant 0 : index
    %129 = vector.load %arg9[%c0_71, %c0_72] : memref<32x32xf32, #tpu.memory_space<vmem>>, vector<32x32xf32>
    tpu.vector_store %arg9[%c0_71, %c0_72], %128 {strides = array<i32>} : memref<32x32xf32, #tpu.memory_space<vmem>>, vector<32x32xf32>,
    %c0_i32_73 = arith.constant 0 : i32
    %130 = arith.cmpi eq, %arg1, %c0_i32_73 : i32
    %131 = arith.extui %130 : i1 to i32
    %c0_i32_74 = arith.constant 0 : i32
    %132 = arith.cmpi ne, %131, %c0_i32_74 : i32
    scf.if %132 {
      %c0_75 = arith.constant 0 : index
      %c0_76 = arith.constant 0 : index
      %133 = vector.load %arg9[%c0_75, %c0_76] : memref<32x32xf32, #tpu.memory_space<vmem>>, vector<32x32xf32>
      %c0_77 = arith.constant 0 : index
      %c0_78 = arith.constant 0 : index
      %c0_79 = arith.constant 0 : index
      %134 = vector.load %arg8[%c0_77, %c0_78, %c0_79] : memref<1x32x32xf32, #tpu.memory_space<vmem>>, vector<1x32x32xf32>
      %135 = vector.shape_cast %134 : vector<1x32x32xf32> to vector<32x32xf32>
      %136 = vector.shape_cast %133 : vector<32x32xf32> to vector<1x32x32xf32>
      tpu.vector_store %arg8[%c0_77, %c0_78, %c0_79], %136 {strides = array<i32>} : memref<1x32x32xf32, #tpu.memory_space<vmem>>, vector<1x32x32xf32>,
    } else {
    }
    return
  }
  func.func @transform_0(%arg0: i32, %arg1: i32) -> (i32, i32, i32) {
    %c0_i32 = arith.constant 0 : i32
    %c0_i32_0 = arith.constant 0 : i32
    return %arg0, %arg1, %c0_i32 : i32, i32, i32
  }
  func.func @transform_1(%arg0: i32, %arg1: i32) -> (i32, i32, i32) {
    %c0_i32 = arith.constant 0 : i32
    %c0_i32_0 = arith.constant 0 : i32
    return %arg0, %arg1, %c0_i32 : i32, i32, i32
  }
  func.func @transform_2(%arg0: i32, %arg1: i32) -> (i32, i32, i32) {
    %c0_i32 = arith.constant 0 : i32
    %c0_i32_0 = arith.constant 0 : i32
    return %arg0, %arg1, %c0_i32 : i32, i32, i32
  }
  func.func @transform_3(%arg0: i32, %arg1: i32) -> (i32, i32, i32) {
    %c0_i32 = arith.constant 0 : i32
    %c0_i32_0 = arith.constant 0 : i32
    return %arg0, %arg1, %c0_i32 : i32, i32, i32
  }
  func.func @transform_4(%arg0: i32, %arg1: i32) -> (i32, i32, i32) {
    %c0_i32 = arith.constant 0 : i32
    %c0_i32_0 = arith.constant 0 : i32
    %c0_i32_1 = arith.constant 0 : i32
    return %arg0, %c0_i32, %c0_i32_0 : i32, i32, i32
  }
  func.func @transform_5(%arg0: i32, %arg1: i32) -> (i32, i32, i32) {
    %c0_i32 = arith.constant 0 : i32
    %c0_i32_0 = arith.constant 0 : i32
    return %arg0, %arg1, %c0_i32 : i32, i32, i32
  }
  func.func @transform_6(%arg0: i32, %arg1: i32) -> (i32, i32, i32) {
    %c0_i32 = arith.constant 0 : i32
    %c0_i32_0 = arith.constant 0 : i32
    %c0_i32_1 = arith.constant 0 : i32
    return %arg0, %c0_i32, %c0_i32_0 : i32, i32, i32
  }
}

</mosaic_0001>

<llo_original>
// kernel: _delta_rule_pallas.1
$region0: #{_delta_rule_pallas.1}
  #allocation0 [shape = 'u32[]', space=smem, size = 0x4, offset = 0x4, fixed_abs, tag = 'smem constant byte address 0x4 - core index']
  #allocation1 [shape = 'u32[144,128]{1,0:T(1,128)}', space=vmem, size = 0x12000, scoped, tag = 'internal scratch']
  #allocation2 [shape = 'f32[32,32]{1,0:T(8,128)}', space=vmem, size = 0x4000, scoped, tag = 'scratch operand']
  #allocation3 [shape = 'f32[16,32]{1,0:T(8,128)}', space=vmem, size = 0x2000, scoped, tag = 'scratch operand']
  #allocation4 [shape = 'f32[16,32]{1,0:T(8,128)}', space=vmem, size = 0x2000, scoped, tag = 'scratch operand']
  #allocation5 [shape = 'f32[16,8]{1,0:T(8,128)}', space=vmem, size = 0x2000, scoped, tag = 'scratch operand']
  %s0 = inlined_call_operand.hbm [shape: f32[4,16,32], index: 0, kind: input, shape index: {}]
  %s1 = inlined_call_operand.hbm [shape: f32[4,16,32], index: 1, kind: input, shape index: {}]
  %s2 = inlined_call_operand.hbm [shape: f32[4,16,32], index: 2, kind: input, shape index: {}]
  %s3 = inlined_call_operand.hbm [shape: f32[4,16,32], index: 3, kind: input, shape index: {}]
  %s4 = inlined_call_operand.hbm [shape: f32[4,32,32], index: 4, kind: input, shape index: {}]
  %s5 = inlined_call_operand.hbm [shape: f32[4,16,32], index: 5, kind: output, shape index: {0}]
  %s6 = inlined_call_operand.hbm [shape: f32[4,32,32], index: 6, kind: output, shape index: {1}]
  %7 = xla_tuple %s5, %s6
  %s8 = sld [smem:[#allocation0]]
  $region89: #{_delta_rule_pallas.1} parent=0
    _
  %s10 = ssub.s32 1, %s8
  %s11 = scalar_select 0, %s10, %s8
  $region1: #{_delta_rule_pallas.1} parent=0
    #allocation6 [shape = 'u8[16384]{0}', space=vmem, size = 0x4000, scoped, tag = 'input window, operand 0']
    #allocation7 [shape = 's32[2]{0}', space=sflag, size = 0x8, scoped, tag = 'scoped memory for _delta_rule_pallas.1']
    #allocation8 [shape = 's32[2]{0}', space=sflag, size = 0x8, scoped, tag = 'scoped memory for _delta_rule_pallas.1']
    #allocation9 [shape = 'u8[16384]{0}', space=vmem, size = 0x4000, scoped, tag = 'input window, operand 1']
    #allocation10 [shape = 's32[2]{0}', space=sflag, size = 0x8, scoped, tag = 'scoped memory for _delta_rule_pallas.1']
    #allocation11 [shape = 'u8[16384]{0}', space=vmem, size = 0x4000, scoped, tag = 'input window, operand 2']
    #allocation12 [shape = 'u8[16384]{0}', space=vmem, size = 0x4000, scoped, tag = 'input window, operand 3']
    #allocation13 [shape = 's32[2]{0}', space=sflag, size = 0x8, scoped, tag = 'scoped memory for _delta_rule_pallas.1']
    #allocation14 [shape = 'u8[32768]{0}', space=vmem, size = 0x8000, scoped, tag = 'input window, operand 4']
    #allocation15 [shape = 'u8[16384]{0}', space=vmem, size = 0x4000, scoped, tag = 'output window, operand 0']
    #allocation16 [shape = 'u8[32768]{0}', space=vmem, size = 0x8000, scoped, tag = 'output window, operand 1']
    #allocation17 [shape = 's32[2]{0}', space=sflag, size = 0x8, scoped, tag = 'scoped memory for _delta_rule_pallas.1']
    %12 = vsyncpa [#allocation7], 0
    %s13 = scalar_lea.sflag [#allocation7], 1
    %14 = vsyncpa %s13, 0
    %15 = vsyncpa [#allocation10], 0
    %s16 = scalar_lea.sflag [#allocation10], 1
    %17 = vsyncpa %s16, 0
    %18 = vsyncpa [#allocation13], 0
    %s19 = scalar_lea.sflag [#allocation13], 1
    %20 = vsyncpa %s19, 0
    %21 = vsyncpa [#allocation8], 0
    %s22 = scalar_lea.sflag [#allocation8], 1
    %23 = vsyncpa %s22, 0
    %24 = vsyncpa [#allocation17], 0
    %s25 = scalar_lea.sflag [#allocation17], 1
    %26 = vsyncpa %s25, 0
    loop: start=0, step=1, limit=6
    $region2: #{_delta_rule_pallas.1} parent=1 // loop_pre_header
      _
    $region3: #{_delta_rule_pallas.1} parent=1 // loop_header
      %s28 = sphi 0, %s32
      %p29 = scmp.ge.s32.totalorder %s28, 6
      %s35 = sphi 0, %s47
      %s36 = sphi 0, %s43
      %s37 = sphi 0, %s35
      %s38 = sphi 0, %s36
      %s39 = sphi 0, %s37
      %s40 = sphi 0, %s38
      %s52 = sphi 0, %s54
      %s55 = sphi 0, %s52
      %s56 = sphi 0, %s55
      %s72 = sphi 0, %s56
      %s80 = sphi 0, %s82
      %s83 = sphi 0, %s80
      %s84 = sphi 0, %s83
      %s100 = sphi 0, %s84
      %s108 = sphi 0, %s110
      %s111 = sphi 0, %s108
      %s112 = sphi 0, %s111
      %s128 = sphi 0, %s112
      %s136 = sphi 0, %s138
      %s139 = sphi 0, %s136
      %s140 = sphi 0, %s139
      %s156 = sphi 0, %s140
      %s162 = sphi 0, %s164
      %s165 = sphi 0, %s162
      %s166 = sphi 0, %s165
      %s182 = sphi 0, %s166
      %s190 = sphi 0, %s192
      %s193 = sphi 0, %s190
      %s194 = sphi 0, %s193
      %s210 = sphi 0, %s194
      %s216 = sphi 0, %s218
      %s219 = sphi 0, %s216
      %s220 = sphi 0, %s219
      %s236 = sphi 0, %s220
    $region4: #{_delta_rule_pallas.1} parent=1 // loop_header_branch
      %31 = sbr.rel (%p29) target = $region8
    $region5: #{_delta_rule_pallas.1} parent=1 // loop_body
      %s33 = ssub.s32 %s28, 1
      %s34 = ssub.s32 %s28, 2
      %s41 = sadd.s32 1, %s36
      %p42 = scmp.ge.s32.totalorder %s41, 1
      %s43 = scalar_select %p42, 0, %s41
      %s44 = sadd.s32 1, %s35
      %s45 = scalar_select %p42, %s44, %s35
      %p46 = scmp.ge.s32.totalorder %s45, 4
      %s47 = scalar_select %p46, 0, %s45
      %s48 = ssub.s32 %s35, %s47
      %s49 = ssub.s32 %s36, %s43
      %s50 = sor.u32 %s48, %s49
      %p51 = scmp.eq.s32.totalorder %s50, 0
      %s53 = sadd.s32 %s52, 1
      %s54 = scalar_select %p51, %s52, %s53
      %p57 = pneg %p51
      %p58 = scmp.eq.s32.totalorder %s28, 3
      %p59 = por %p57, %p58
      %p60 = scmp.ne.s32.totalorder %s52, %s55
      %p61 = scmp.eq.s32.totalorder %s28, 0
      %p62 = por %p60, %p61
      %p63 = scmp.ne.s32.totalorder %s52, %s55
      %p64 = scmp.eq.s32.totalorder %s33, 3
      %p65 = por %p63, %p64
      %p66 = scmp.ne.s32.totalorder %s55, %s56
      %p67 = scmp.eq.s32.totalorder %s33, 0
      %p68 = por %p66, %p67
      %p69 = scmp.ne.s32.totalorder %s55, %s56
      %p70 = scmp.eq.s32.totalorder %s34, 3
      %p71 = por %p69, %p70
      %p73 = scmp.ne.s32.totalorder %s56, %s72
      %p74 = scmp.eq.s32.totalorder %s34, 0
      %p75 = por %p73, %p74
      %s76 = ssub.s32 %s35, %s47
      %s77 = ssub.s32 %s36, %s43
      %s78 = sor.u32 %s76, %s77
      %p79 = scmp.eq.s32.totalorder %s78, 0
      %s81 = sadd.s32 %s80, 1
      %s82 = scalar_select %p79, %s80, %s81
      %p85 = pneg %p79
      %p86 = scmp.eq.s32.totalorder %s28, 3
      %p87 = por %p85, %p86
      %p88 = scmp.ne.s32.totalorder %s80, %s83
      %p89 = scmp.eq.s32.totalorder %s28, 0
      %p90 = por %p88, %p89
      %p91 = scmp.ne.s32.totalorder %s80, %s83
      %p92 = scmp.eq.s32.totalorder %s33, 3
      %p93 = por %p91, %p92
      %p94 = scmp.ne.s32.totalorder %s83, %s84
      %p95 = scmp.eq.s32.totalorder %s33, 0
      %p96 = por %p94, %p95
      %p97 = scmp.ne.s32.totalorder %s83, %s84
      %p98 = scmp.eq.s32.totalorder %s34, 3
      %p99 = por %p97, %p98
      %p101 = scmp.ne.s32.totalorder %s84, %s100
      %p102 = scmp.eq.s32.totalorder %s34, 0
      %p103 = por %p101, %p102
      %s104 = ssub.s32 %s35, %s47
      %s105 = ssub.s32 %s36, %s43
      %s106 = sor.u32 %s104, %s105
      %p107 = scmp.eq.s32.totalorder %s106, 0
      %s109 = sadd.s32 %s108, 1
      %s110 = scalar_select %p107, %s108, %s109
      %p113 = pneg %p107
      %p114 = scmp.eq.s32.totalorder %s28, 3
      %p115 = por %p113, %p114
      %p116 = scmp.ne.s32.totalorder %s108, %s111
      %p117 = scmp.eq.s32.totalorder %s28, 0
      %p118 = por %p116, %p117
      %p119 = scmp.ne.s32.totalorder %s108, %s111
      %p120 = scmp.eq.s32.totalorder %s33, 3
      %p121 = por %p119, %p120
      %p122 = scmp.ne.s32.totalorder %s111, %s112
      %p123 = scmp.eq.s32.totalorder %s33, 0
      %p124 = por %p122, %p123
      %p125 = scmp.ne.s32.totalorder %s111, %s112
      %p126 = scmp.eq.s32.totalorder %s34, 3
      %p127 = por %p125, %p126
      %p129 = scmp.ne.s32.totalorder %s112, %s128
      %p130 = scmp.eq.s32.totalorder %s34, 0
      %p131 = por %p129, %p130
      %s132 = ssub.s32 %s35, %s47
      %s133 = ssub.s32 %s36, %s43
      %s134 = sor.u32 %s132, %s133
      %p135 = scmp.eq.s32.totalorder %s134, 0
      %s137 = sadd.s32 %s136, 1
      %s138 = scalar_select %p135, %s136, %s137
      %p141 = pneg %p135
      %p142 = scmp.eq.s32.totalorder %s28, 3
      %p143 = por %p141, %p142
      %p144 = scmp.ne.s32.totalorder %s136, %s139
      %p145 = scmp.eq.s32.totalorder %s28, 0
      %p146 = por %p144, %p145
      %p147 = scmp.ne.s32.totalorder %s136, %s139
      %p148 = scmp.eq.s32.totalorder %s33, 3
      %p149 = por %p147, %p148
      %p150 = scmp.ne.s32.totalorder %s139, %s140
      %p151 = scmp.eq.s32.totalorder %s33, 0
      %p152 = por %p150, %p151
      %p153 = scmp.ne.s32.totalorder %s139, %s140
      %p154 = scmp.eq.s32.totalorder %s34, 3
      %p155 = por %p153, %p154
      %p157 = scmp.ne.s32.totalorder %s140, %s156
      %p158 = scmp.eq.s32.totalorder %s34, 0
      %p159 = por %p157, %p158
      %s160 = ssub.s32 %s35, %s47
      %p161 = scmp.eq.s32.totalorder %s160, 0
      %s163 = sadd.s32 %s162, 1
      %s164 = scalar_select %p161, %s162, %s163
      %p167 = pneg %p161
      %p168 = scmp.eq.s32.totalorder %s28, 3
      %p169 = por %p167, %p168
      %p170 = scmp.ne.s32.totalorder %s162, %s165
      %p171 = scmp.eq.s32.totalorder %s28, 0
      %p172 = por %p170, %p171
      %p173 = scmp.ne.s32.totalorder %s162, %s165
      %p174 = scmp.eq.s32.totalorder %s33, 3
      %p175 = por %p173, %p174
      %p176 = scmp.ne.s32.totalorder %s165, %s166
      %p177 = scmp.eq.s32.totalorder %s33, 0
      %p178 = por %p176, %p177
      %p179 = scmp.ne.s32.totalorder %s165, %s166
      %p180 = scmp.eq.s32.totalorder %s34, 3
      %p181 = por %p179, %p180
      %p183 = scmp.ne.s32.totalorder %s166, %s182
      %p184 = scmp.eq.s32.totalorder %s34, 0
      %p185 = por %p183, %p184
      %s186 = ssub.s32 %s35, %s47
      %s187 = ssub.s32 %s36, %s43
      %s188 = sor.u32 %s186, %s187
      %p189 = scmp.eq.s32.totalorder %s188, 0
      %s191 = sadd.s32 %s190, 1
      %s192 = scalar_select %p189, %s190, %s191
      %p195 = pneg %p189
      %p196 = scmp.eq.s32.totalorder %s28, 3
      %p197 = por %p195, %p196
      %p198 = scmp.ne.s32.totalorder %s190, %s193
      %p199 = scmp.eq.s32.totalorder %s28, 0
      %p200 = por %p198, %p199
      %p201 = scmp.ne.s32.totalorder %s190, %s193
      %p202 = scmp.eq.s32.totalorder %s33, 3
      %p203 = por %p201, %p202
      %p204 = scmp.ne.s32.totalorder %s193, %s194
      %p205 = scmp.eq.s32.totalorder %s33, 0
      %p206 = por %p204, %p205
      %p207 = scmp.ne.s32.totalorder %s193, %s194
      %p208 = scmp.eq.s32.totalorder %s34, 3
      %p209 = por %p207, %p208
      %p211 = scmp.ne.s32.totalorder %s194, %s210
      %p212 = scmp.eq.s32.totalorder %s34, 0
      %p213 = por %p211, %p212
      %s214 = ssub.s32 %s35, %s47
      %p215 = scmp.eq.s32.totalorder %s214, 0
      %s217 = sadd.s32 %s216, 1
      %s218 = scalar_select %p215, %s216, %s217
      %p221 = pneg %p215
      %p222 = scmp.eq.s32.totalorder %s28, 3
      %p223 = por %p221, %p222
      %p224 = scmp.ne.s32.totalorder %s216, %s219
      %p225 = scmp.eq.s32.totalorder %s28, 0
      %p226 = por %p224, %p225
      %p227 = scmp.ne.s32.totalorder %s216, %s219
      %p228 = scmp.eq.s32.totalorder %s33, 3
      %p229 = por %p227, %p228
      %p230 = scmp.ne.s32.totalorder %s219, %s220
      %p231 = scmp.eq.s32.totalorder %s33, 0
      %p232 = por %p230, %p231
      %p233 = scmp.ne.s32.totalorder %s219, %s220
      %p234 = scmp.eq.s32.totalorder %s34, 3
      %p235 = por %p233, %p234
      %p237 = scmp.ne.s32.totalorder %s220, %s236
      %p238 = scmp.eq.s32.totalorder %s34, 0
      %p239 = por %p237, %p238
      %p240 = scmp.le.s32.totalorder 1, %s28
      %p241 = scmp.lt.s32.totalorder %s28, 5
      %p242 = pnand %p240, %p241
      %p243 = pneg %p242
      // Predicated region
      $region9: #{_delta_rule_pallas.1} parent=5 // pred_check
        _
      $region10: #{_delta_rule_pallas.1} parent=5 // pred_check_branch
        %245 = sbr.rel (%p242) target = $region12
      $region11: #{_delta_rule_pallas.1} parent=5 // pred_region
        %s246 = ssub.s32 %s28, 1
      $region12: #{_delta_rule_pallas.1} parent=5 // pred_fallthru
        _
      %p247 = scmp.lt.s32.totalorder %s28, 4
      // Predicated region
      $region13: #{_delta_rule_pallas.1} parent=5 // pred_check
        %p248 = pneg %p247
      $region14: #{_delta_rule_pallas.1} parent=5 // pred_check_branch
        %250 = sbr.rel (%p248) target = $region16
      $region15: #{_delta_rule_pallas.1} parent=5 // pred_region
        // Predicated region
        $region17: #{_delta_rule_pallas.1} parent=15 // pred_check
          %p251 = pneg %p62
        $region18: #{_delta_rule_pallas.1} parent=15 // pred_check_branch
          %253 = sbr.rel (%p251) target = $region20
        $region19: #{_delta_rule_pallas.1} parent=15 // pred_region
          %s254 = sand.u32 %s52, 1
          %s255 = scalar_lea.sflag [#allocation7], %s254
          %s256 = sand.u32 %s52, 1
          %s257 = smul.addr %s256, 16
          %s258 = scalar_lea.vmem [#allocation6], %s257
          %s259 = smul.u32 2, %s36
          %s261 = ssub.s32 256, 256
          %262 = vsyncadd %s255, %s261
          %s263 = smul.addr %s35, 2
          %s264 = sadd.s32 %s259, %s263
          %s265 = smul.addr %s264, 128
          %s266 = scalar_lea.hbm %s0, %s265
          %s267 = sshll.u32 %s258, 4
          %s268 = int_to_ptr.vmem [resolvable:$true] %s267
          %273 = dma.hbm_to_vmem [thread:$0]  %s266, 256, %s268, %s255, 128, 128, 8
        $region20: #{_delta_rule_pallas.1} parent=15 // pred_fallthru
          _
        // Predicated region
        $region21: #{_delta_rule_pallas.1} parent=15 // pred_check
          %p274 = pneg %p90
        $region22: #{_delta_rule_pallas.1} parent=15 // pred_check_branch
          %276 = sbr.rel (%p274) target = $region24
        $region23: #{_delta_rule_pallas.1} parent=15 // pred_region
          %s277 = sand.u32 %s28, 1
          %s278 = scalar_lea.sflag [#allocation10], %s277
          %s279 = sand.u32 %s80, 1
          %s280 = smul.addr %s279, 16
          %s281 = scalar_lea.vmem [#allocation9], %s280
          %s282 = smul.u32 2, %s36
          %s284 = ssub.s32 256, 256
          %285 = vsyncadd %s278, %s284
          %s286 = smul.addr %s35, 2
          %s287 = sadd.s32 %s282, %s286
          %s288 = smul.addr %s287, 128
          %s289 = scalar_lea.hbm %s1, %s288
          %s290 = sshll.u32 %s281, 4
          %s291 = int_to_ptr.vmem [resolvable:$true] %s290
          %296 = dma.hbm_to_vmem [thread:$0]  %s289, 256, %s291, %s278, 128, 128, 8
        $region24: #{_delta_rule_pallas.1} parent=15 // pred_fallthru
          _
        // Predicated region
        $region25: #{_delta_rule_pallas.1} parent=15 // pred_check
          %p297 = pneg %p118
        $region26: #{_delta_rule_pallas.1} parent=15 // pred_check_branch
          %299 = sbr.rel (%p297) target = $region28
        $region27: #{_delta_rule_pallas.1} parent=15 // pred_region
          %s300 = sand.u32 %s28, 1
          %s301 = scalar_lea.sflag [#allocation10], %s300
          %s302 = sand.u32 %s108, 1
          %s303 = smul.addr %s302, 16
          %s304 = scalar_lea.vmem [#allocation11], %s303
          %s305 = smul.u32 2, %s36
          %s307 = ssub.s32 256, 256
          %308 = vsyncadd %s301, %s307
          %s309 = smul.addr %s35, 2
          %s310 = sadd.s32 %s305, %s309
          %s311 = smul.addr %s310, 128
          %s312 = scalar_lea.hbm %s2, %s311
          %s313 = sshll.u32 %s304, 4
          %s314 = int_to_ptr.vmem [resolvable:$true] %s313
          %319 = dma.hbm_to_vmem [thread:$0]  %s312, 256, %s314, %s301, 128, 128, 8
        $region28: #{_delta_rule_pallas.1} parent=15 // pred_fallthru
          _
        // Predicated region
        $region29: #{_delta_rule_pallas.1} parent=15 // pred_check
          %p320 = pneg %p146
        $region30: #{_delta_rule_pallas.1} parent=15 // pred_check_branch
          %322 = sbr.rel (%p320) target = $region32
        $region31: #{_delta_rule_pallas.1} parent=15 // pred_region
          %s323 = sand.u32 %s28, 1
          %s324 = scalar_lea.sflag [#allocation13], %s323
          %s325 = sand.u32 %s136, 1
          %s326 = smul.addr %s325, 16
          %s327 = scalar_lea.vmem [#allocation12], %s326
          %s328 = smul.u32 2, %s36
          %s330 = ssub.s32 256, 256
          %331 = vsyncadd %s324, %s330
          %s332 = smul.addr %s35, 2
          %s333 = sadd.s32 %s328, %s332
          %s334 = smul.addr %s333, 128
          %s335 = scalar_lea.hbm %s3, %s334
          %s336 = sshll.u32 %s327, 4
          %s337 = int_to_ptr.vmem [resolvable:$true] %s336
          %342 = dma.hbm_to_vmem [thread:$0]  %s335, 256, %s337, %s324, 128, 128, 8
        $region32: #{_delta_rule_pallas.1} parent=15 // pred_fallthru
          _
        // Predicated region
        $region33: #{_delta_rule_pallas.1} parent=15 // pred_check
          %p343 = pneg %p172
        $region34: #{_delta_rule_pallas.1} parent=15 // pred_check_branch
          %345 = sbr.rel (%p343) target = $region36
        $region35: #{_delta_rule_pallas.1} parent=15 // pred_region
          %s346 = sand.u32 %s28, 1
          %s347 = scalar_lea.sflag [#allocation13], %s346
          %s348 = sand.u32 %s162, 1
          %s349 = smul.addr %s348, 32
          %s350 = scalar_lea.vmem [#allocation14], %s349
          %s352 = ssub.s32 512, 512
          %353 = vsyncadd %s347, %s352
          %s354 = smul.addr %s35, 4
          %s355 = smul.addr %s354, 128
          %s356 = scalar_lea.hbm %s4, %s355
          %s357 = sshll.u32 %s350, 4
          %s358 = int_to_ptr.vmem [resolvable:$true] %s357
          %363 = dma.hbm_to_vmem [thread:$0]  %s356, 512, %s358, %s347, 128, 128, 8
        $region36: #{_delta_rule_pallas.1} parent=15 // pred_fallthru
          _
      $region16: #{_delta_rule_pallas.1} parent=5 // pred_fallthru
        _
      %p364 = scmp.le.s32.totalorder 1, %s28
      %p365 = scmp.lt.s32.totalorder %s28, 5
      %p366 = pnand %p364, %p365
      %p367 = pneg %p366
      // Predicated region
      $region37: #{_delta_rule_pallas.1} parent=5 // pred_check
        _
      $region38: #{_delta_rule_pallas.1} parent=5 // pred_check_branch
        %369 = sbr.rel (%p366) target = $region40
      $region39: #{_delta_rule_pallas.1} parent=5 // pred_region
        %s370 = ssub.s32 %s28, 1
        %s371 = sand.u32 %s55, 1
        %s372 = scalar_lea.sflag [#allocation7], %s371
        %s373 = sand.u32 %s55, 1
        %s374 = smul.addr %s373, 16
        %s375 = scalar_lea.vmem [#allocation6], %s374
        // Predicated region
        $region41: #{_delta_rule_pallas.1} parent=39 // pred_check
          %p376 = pneg %p68
        $region42: #{_delta_rule_pallas.1} parent=39 // pred_check_branch
          %378 = sbr.rel (%p376) target = $region44
        $region43: #{_delta_rule_pallas.1} parent=39 // pred_region
          %379 = dma.done %s372, 256
        $region44: #{_delta_rule_pallas.1} parent=39 // pred_fallthru
          _
        %s380 = sand.u32 %s33, 1
        %s381 = scalar_lea.sflag [#allocation10], %s380
        %s382 = sand.u32 %s83, 1
        %s383 = smul.addr %s382, 16
        %s384 = scalar_lea.vmem [#allocation9], %s383
        // Predicated region
        $region45: #{_delta_rule_pallas.1} parent=39 // pred_check
          %p385 = pneg %p96
        $region46: #{_delta_rule_pallas.1} parent=39 // pred_check_branch
          %387 = sbr.rel (%p385) target = $region48
        $region47: #{_delta_rule_pallas.1} parent=39 // pred_region
          %388 = dma.done %s381, 256
        $region48: #{_delta_rule_pallas.1} parent=39 // pred_fallthru
          _
        %s389 = sand.u32 %s33, 1
        %s390 = scalar_lea.sflag [#allocation10], %s389
        %s391 = sand.u32 %s111, 1
        %s392 = smul.addr %s391, 16
        %s393 = scalar_lea.vmem [#allocation11], %s392
        // Predicated region
        $region49: #{_delta_rule_pallas.1} parent=39 // pred_check
          %p394 = pneg %p124
        $region50: #{_delta_rule_pallas.1} parent=39 // pred_check_branch
          %396 = sbr.rel (%p394) target = $region52
        $region51: #{_delta_rule_pallas.1} parent=39 // pred_region
          %397 = dma.done %s390, 256
        $region52: #{_delta_rule_pallas.1} parent=39 // pred_fallthru
          _
        %s398 = sand.u32 %s33, 1
        %s399 = scalar_lea.sflag [#allocation13], %s398
        %s400 = sand.u32 %s139, 1
        %s401 = smul.addr %s400, 16
        %s402 = scalar_lea.vmem [#allocation12], %s401
        // Predicated region
        $region53: #{_delta_rule_pallas.1} parent=39 // pred_check
          %p403 = pneg %p152
        $region54: #{_delta_rule_pallas.1} parent=39 // pred_check_branch
          %405 = sbr.rel (%p403) target = $region56
        $region55: #{_delta_rule_pallas.1} parent=39 // pred_region
          %406 = dma.done %s399, 256
        $region56: #{_delta_rule_pallas.1} parent=39 // pred_fallthru
          _
        %s407 = sand.u32 %s33, 1
        %s408 = scalar_lea.sflag [#allocation13], %s407
        %s409 = sand.u32 %s165, 1
        %s410 = smul.addr %s409, 32
        %s411 = scalar_lea.vmem [#allocation14], %s410
        // Predicated region
        $region57: #{_delta_rule_pallas.1} parent=39 // pred_check
          %p412 = pneg %p178
        $region58: #{_delta_rule_pallas.1} parent=39 // pred_check_branch
          %414 = sbr.rel (%p412) target = $region60
        $region59: #{_delta_rule_pallas.1} parent=39 // pred_region
          %415 = dma.done %s408, 512
        $region60: #{_delta_rule_pallas.1} parent=39 // pred_fallthru
          _
        %s416 = sand.u32 %s55, 1
        %s417 = scalar_lea.sflag [#allocation7], %s416
        %s418 = sand.u32 %s55, 1
        %s419 = smul.addr %s418, 16
        %s420 = scalar_lea.vmem [#allocation6], %s419
        %p421 = pneg %p68
        %p422 = pneg %p65
        %s423 = sand.u32 %s33, 1
        %s424 = scalar_lea.sflag [#allocation10], %s423
        %s425 = sand.u32 %s83, 1
        %s426 = smul.addr %s425, 16
        %s427 = scalar_lea.vmem [#allocation9], %s426
        %p428 = pneg %p96
        %p429 = pneg %p93
        %s430 = sand.u32 %s33, 1
        %s431 = scalar_lea.sflag [#allocation10], %s430
        %s432 = sand.u32 %s111, 1
        %s433 = smul.addr %s432, 16
        %s434 = scalar_lea.vmem [#allocation11], %s433
        %p435 = pneg %p124
        %p436 = pneg %p121
        %s437 = sand.u32 %s33, 1
        %s438 = scalar_lea.sflag [#allocation13], %s437
        %s439 = sand.u32 %s139, 1
        %s440 = smul.addr %s439, 16
        %s441 = scalar_lea.vmem [#allocation12], %s440
        %p442 = pneg %p152
        %p443 = pneg %p149
        %s444 = sand.u32 %s33, 1
        %s445 = scalar_lea.sflag [#allocation13], %s444
        %s446 = sand.u32 %s165, 1
        %s447 = smul.addr %s446, 32
        %s448 = scalar_lea.vmem [#allocation14], %s447
        %p449 = pneg %p178
        %p450 = pneg %p175
        %p451 = pneg %p206
        %p452 = pneg %p203
        %s453 = sand.u32 %s193, 1
        %s454 = scalar_lea.sflag [#allocation8], %s453
        %s455 = sand.u32 %s193, 1
        %s456 = smul.addr %s455, 16
        %s457 = scalar_lea.vmem [#allocation15], %s456
        %p458 = pneg %p232
        %p459 = pneg %p229
        %s460 = sand.u32 %s219, 1
        %s461 = scalar_lea.sflag [#allocation17], %s460
        %s462 = sand.u32 %s219, 1
        %s463 = smul.addr %s462, 32
        %s464 = scalar_lea.vmem [#allocation16], %s463
        %s465 = smul.u32 2, %s38
        %s466 = smul.u32 2, %s38
        %s467 = smul.u32 2, %s38
        %s468 = smul.u32 2, %s38
        %s469 = smul.u32 2, %s38
        %p470 = scmp.eq.s32.totalorder %s38, 0
        // Predicated region
        $region61: #{_delta_rule_pallas.1} parent=39 // pred_check
          %p471 = pneg %p470
        $region62: #{_delta_rule_pallas.1} parent=39 // pred_check_branch
          %473 = sbr.rel (%p471) target = $region64
        $region63: #{_delta_rule_pallas.1} parent=39 // pred_region
          %v474 = vld [vmem:[%s411] sm:$0xff]
          %v475 = vld [vmem:[%s411 + $0x8] sm:$0xff]
          %v476 = vld [vmem:[%s411 + $0x10] sm:$0xff]
          %v477 = vld [vmem:[%s411 + $0x18] sm:$0xff]
          %vm478 = vcmask 261120
          %479 = vst.msk [vmem:[#allocation2] sm:$0xff] %vm478, %v474
          %480 = vst.msk [vmem:[#allocation2 + $0x8] sm:$0xff] %vm478, %v475
          %481 = vst.msk [vmem:[#allocation2 + $0x10] sm:$0xff] %vm478, %v476
          %482 = vst.msk [vmem:[#allocation2 + $0x18] sm:$0xff] %vm478, %v477
        $region64: #{_delta_rule_pallas.1} parent=39 // pred_fallthru
          _
        %v483 = vlaneseq
        %v484 = vshrl.u32 %v483, 7
        %v485 = vlaneseq
        %v486 = vand.u32 %v485, 127
        %vm487 = vcmp.lt.s32.totalorder %v486, %v484
        %vm488 = vcmp.le.s32.totalorder %v486, %v484
        %vm489 = vcmp.eq.s32.totalorder %v486, %v484
        %v490 = vsel %vm489, 1.0, 0.0
        %v491 = vld [vmem:[%s375] sm:$0xff]
        %v492 = vld [vmem:[%s375 + $0x8] sm:$0xff]
        %v493 = vmax.f32 %v491, -10000.0
        %v494 = vmax.f32 %v492, -10000.0
        %v495 = vmin.f32 %v493, 10000.0
        %v496 = vmin.f32 %v494, 10000.0
        %v497 = vld [vmem:[%s384] sm:$0xff]
        %v498 = vld [vmem:[%s384 + $0x8] sm:$0xff]
        %v499 = vmax.f32 %v497, -10000.0
        %v500 = vmax.f32 %v498, -10000.0
        %v501 = vmin.f32 %v499, 10000.0
        %v502 = vmin.f32 %v500, 10000.0
        %v503 = vld [vmem:[%s393] sm:$0xff]
        %v504 = vld [vmem:[%s393 + $0x8] sm:$0xff]
        %v505 = vmax.f32 %v503, -10000.0
        %v506 = vmax.f32 %v504, -10000.0
        %v507 = vmin.f32 %v505, 10000.0
        %v508 = vmin.f32 %v506, 10000.0
        %v509 = vld [vmem:[%s402] sm:$0xff]
        %v510 = vld [vmem:[%s402 + $0x8] sm:$0xff]
        %v511 = vmax.f32 %v509, 1e-06
        %v512 = vmax.f32 %v510, 1e-06
        %v513 = vmin.f32 %v511, 10000.0
        %v514 = vmin.f32 %v512, 10000.0
        %v515 = vmul.f32 %v501, %v513
        %v516 = vmul.f32 %v502, %v514
        %v517 = vmul.f32 %v507, %v513
        %v518 = vmul.f32 %v508, %v514
        %vm519 = vcmask 261120
        %v521 = vsel %vm519, %v515, 0
        %v524 = vsel %vm519, %v501, 0
        %526 = vmatprep.subr.mxu0 0.0
        %527 = vmatpush1.xpose.msra.mxu0 0.0
        %528 = vmatprep.subr.mxu0 0.0
        %529 = vmatpush1.xpose.msra.mxu0 0.0
        %530 = vmatprep.subr.mxu0 0.0
        %531 = vmatpush1.xpose.msra.mxu0 0.0
        %532 = vmatprep.subr.mxu0 0.0
        %533 = vmatpush1.xpose.msra.mxu0 0.0
        %534 = vmatprep.subr.mxu0 0.0
        %535 = vmatpush1.xpose.msra.mxu0 0.0
        %536 = vmatprep.subr.mxu0 0.0
        %537 = vmatpush1.xpose.msra.mxu0 0.0
        %538 = vmatprep.subr.mxu0 0.0
        %539 = vmatpush1.xpose.msra.mxu0 0.0
        %540 = vmatprep.subr.mxu0 0.0
        %541 = vmatpush1.xpose.msra.mxu0 0.0
        %542 = vmatprep.subr.mxu0 0.0
        %543 = vmatpush1.xpose.msra.mxu0 0.0
        %544 = vmatprep.subr.mxu0 0.0
        %545 = vmatpush1.xpose.msra.mxu0 0.0
        %546 = vmatprep.subr.mxu0 0.0
        %547 = vmatpush1.xpose.msra.mxu0 0.0
        %548 = vmatprep.subr.mxu0 0.0
        %549 = vmatpush1.xpose.msra.mxu0 0.0
        %550 = vmatprep.subr.mxu0 0.0
        %551 = vmatpush1.xpose.msra.mxu0 0.0
        %552 = vmatprep.subr.mxu0 0.0
        %553 = vmatpush1.xpose.msra.mxu0 0.0
        %554 = vmatprep.subr.mxu0 0.0
        %555 = vmatpush1.xpose.msra.mxu0 0.0
        %556 = vmatprep.subr.mxu0 0.0
        %557 = vmatpush1.xpose.msra.mxu0 %v524
        %558 = vmatprep.subr.mxu0 0.0
        %559 = vmatpush2.xpose.msra.mxu0 0.0
        %560 = vmatprep.subr.mxu0 0.0
        %561 = vmatpush2.xpose.msra.mxu0 0.0
        %562 = vmatprep.subr.mxu0 0.0
        %563 = vmatpush2.xpose.msra.mxu0 0.0
        %564 = vmatprep.subr.mxu0 0.0
        %565 = vmatpush2.xpose.msra.mxu0 0.0
        %566 = vmatprep.subr.mxu0 0.0
        %567 = vmatpush2.xpose.msra.mxu0 0.0
        %568 = vmatprep.subr.mxu0 0.0
        %569 = vmatpush2.xpose.msra.mxu0 0.0
        %570 = vmatprep.subr.mxu0 0.0
        %571 = vmatpush2.xpose.msra.mxu0 0.0
        %572 = vmatprep.subr.mxu0 0.0
        %573 = vmatpush2.xpose.msra.mxu0 0.0
        %574 = vmatprep.subr.mxu0 0.0
        %575 = vmatpush2.xpose.msra.mxu0 0.0
        %576 = vmatprep.subr.mxu0 0.0
        %577 = vmatpush2.xpose.msra.mxu0 0.0
        %578 = vmatprep.subr.mxu0 0.0
        %579 = vmatpush2.xpose.msra.mxu0 0.0
        %580 = vmatprep.subr.mxu0 0.0
        %581 = vmatpush2.xpose.msra.mxu0 0.0
        %582 = vmatprep.subr.mxu0 0.0
        %583 = vmatpush2.xpose.msra.mxu0 0.0
        %584 = vmatprep.subr.mxu0 0.0
        %585 = vmatpush2.xpose.msra.mxu0 0.0
        %586 = vmatprep.subr.mxu0 0.0
        %587 = vmatpush2.xpose.msra.mxu0 0.0
        %588 = vmatprep.subr.mxu0 0.0
        %589 = vmatpush2.xpose.msra.mxu0 0.0
        %590 = vmatprep.mubr.f32.mxu0 0.0
        %591 = vmatmul.mubr.f32.gmra.mxu0 %v521
        %v592 = vpop.f32.mrf.mxu0
        %v593 = vadd.f32 0.0, %v592
        %v594 = vpop.f32.mrf.mxu0
        %595 = vdwg.mxu0
        %v597 = vsel %vm519, %v516, 0
        %v600 = vsel %vm519, %v502, 0
        %602 = vmatprep.subr.mxu0 0.0
        %603 = vmatpush1.xpose.msra.mxu0 0.0
        %604 = vmatprep.subr.mxu0 0.0
        %605 = vmatpush1.xpose.msra.mxu0 0.0
        %606 = vmatprep.subr.mxu0 0.0
        %607 = vmatpush1.xpose.msra.mxu0 0.0
        %608 = vmatprep.subr.mxu0 0.0
        %609 = vmatpush1.xpose.msra.mxu0 0.0
        %610 = vmatprep.subr.mxu0 0.0
        %611 = vmatpush1.xpose.msra.mxu0 0.0
        %612 = vmatprep.subr.mxu0 0.0
        %613 = vmatpush1.xpose.msra.mxu0 0.0
        %614 = vmatprep.subr.mxu0 0.0
        %615 = vmatpush1.xpose.msra.mxu0 0.0
        %616 = vmatprep.subr.mxu0 0.0
        %617 = vmatpush1.xpose.msra.mxu0 0.0
        %618 = vmatprep.subr.mxu0 0.0
        %619 = vmatpush1.xpose.msra.mxu0 0.0
        %620 = vmatprep.subr.mxu0 0.0
        %621 = vmatpush1.xpose.msra.mxu0 0.0
        %622 = vmatprep.subr.mxu0 0.0
        %623 = vmatpush1.xpose.msra.mxu0 0.0
        %624 = vmatprep.subr.mxu0 0.0
        %625 = vmatpush1.xpose.msra.mxu0 0.0
        %626 = vmatprep.subr.mxu0 0.0
        %627 = vmatpush1.xpose.msra.mxu0 0.0
        %628 = vmatprep.subr.mxu0 0.0
        %629 = vmatpush1.xpose.msra.mxu0 0.0
        %630 = vmatprep.subr.mxu0 0.0
        %631 = vmatpush1.xpose.msra.mxu0 0.0
        %632 = vmatprep.subr.mxu0 0.0
        %633 = vmatpush1.xpose.msra.mxu0 %v600
        %634 = vmatprep.subr.mxu0 0.0
        %635 = vmatpush2.xpose.msra.mxu0 0.0
        %636 = vmatprep.subr.mxu0 0.0
        %637 = vmatpush2.xpose.msra.mxu0 0.0
        %638 = vmatprep.subr.mxu0 0.0
        %639 = vmatpush2.xpose.msra.mxu0 0.0
        %640 = vmatprep.subr.mxu0 0.0
        %641 = vmatpush2.xpose.msra.mxu0 0.0
        %642 = vmatprep.subr.mxu0 0.0
        %643 = vmatpush2.xpose.msra.mxu0 0.0
        %644 = vmatprep.subr.mxu0 0.0
        %645 = vmatpush2.xpose.msra.mxu0 0.0
        %646 = vmatprep.subr.mxu0 0.0
        %647 = vmatpush2.xpose.msra.mxu0 0.0
        %648 = vmatprep.subr.mxu0 0.0
        %649 = vmatpush2.xpose.msra.mxu0 0.0
        %650 = vmatprep.subr.mxu0 0.0
        %651 = vmatpush2.xpose.msra.mxu0 0.0
        %652 = vmatprep.subr.mxu0 0.0
        %653 = vmatpush2.xpose.msra.mxu0 0.0
        %654 = vmatprep.subr.mxu0 0.0
        %655 = vmatpush2.xpose.msra.mxu0 0.0
        %656 = vmatprep.subr.mxu0 0.0
        %657 = vmatpush2.xpose.msra.mxu0 0.0
        %658 = vmatprep.subr.mxu0 0.0
        %659 = vmatpush2.xpose.msra.mxu0 0.0
        %660 = vmatprep.subr.mxu0 0.0
        %661 = vmatpush2.xpose.msra.mxu0 0.0
        %662 = vmatprep.subr.mxu0 0.0
        %663 = vmatpush2.xpose.msra.mxu0 0.0
        %664 = vmatprep.subr.mxu0 0.0
        %665 = vmatpush2.xpose.msra.mxu0 0.0
        %666 = vmatprep.mubr.f32.mxu0 0.0
        %667 = vmatmul.mubr.f32.gmra.mxu0 %v597
        %v668 = vpop.f32.mrf.mxu0
        %v669 = vadd.f32 0.0, %v668
        %v670 = vpop.f32.mrf.mxu0
        %671 = vdwg.mxu0
        %v672 = vsub.f32 0.0, %v593
        %v673 = vsub.f32 0.0, %v669
        %v674 = vsel %vm487, 1, 0
        %vm675 = vcmp.eq.s32.totalorder %v674, 1
        %v676 = vsel %vm675, %v672, %v490
        %v677 = vsel %vm675, %v673, %v490
        %vm678 = vcmask 64512
        %v680 = vsel %vm678, %v676, 0
        %682 = vmatprep.subr.mxu0 0.0
        %683 = vmatpush1.msra.mxu0 0.0
        %684 = vmatprep.subr.mxu0 0.0
        %685 = vmatpush1.msra.mxu0 0.0
        %686 = vmatprep.subr.mxu0 0.0
        %687 = vmatpush1.msra.mxu0 0.0
        %688 = vmatprep.subr.mxu0 0.0
        %689 = vmatpush1.msra.mxu0 0.0
        %690 = vmatprep.subr.mxu0 0.0
        %691 = vmatpush1.msra.mxu0 0.0
        %692 = vmatprep.subr.mxu0 0.0
        %693 = vmatpush1.msra.mxu0 0.0
        %694 = vmatprep.subr.mxu0 0.0
        %695 = vmatpush1.msra.mxu0 0.0
        %696 = vmatprep.subr.mxu0 0.0
        %697 = vmatpush1.msra.mxu0 0.0
        %698 = vmatprep.subr.mxu0 0.0
        %699 = vmatpush1.msra.mxu0 0.0
        %700 = vmatprep.subr.mxu0 0.0
        %701 = vmatpush1.msra.mxu0 0.0
        %702 = vmatprep.subr.mxu0 0.0
        %703 = vmatpush1.msra.mxu0 0.0
        %704 = vmatprep.subr.mxu0 0.0
        %705 = vmatpush1.msra.mxu0 0.0
        %706 = vmatprep.subr.mxu0 0.0
        %707 = vmatpush1.msra.mxu0 0.0
        %708 = vmatprep.subr.mxu0 0.0
        %709 = vmatpush1.msra.mxu0 0.0
        %710 = vmatprep.subr.mxu0 0.0
        %711 = vmatpush1.msra.mxu0 0.0
        %712 = vmatprep.subr.mxu0 0.0
        %713 = vmatpush1.msra.mxu0 %v515
        %714 = vmatprep.subr.mxu0 0.0
        %715 = vmatpush2.msra.mxu0 0.0
        %716 = vmatprep.subr.mxu0 0.0
        %717 = vmatpush2.msra.mxu0 0.0
        %718 = vmatprep.subr.mxu0 0.0
        %719 = vmatpush2.msra.mxu0 0.0
        %720 = vmatprep.subr.mxu0 0.0
        %721 = vmatpush2.msra.mxu0 0.0
        %722 = vmatprep.subr.mxu0 0.0
        %723 = vmatpush2.msra.mxu0 0.0
        %724 = vmatprep.subr.mxu0 0.0
        %725 = vmatpush2.msra.mxu0 0.0
        %726 = vmatprep.subr.mxu0 0.0
        %727 = vmatpush2.msra.mxu0 0.0
        %728 = vmatprep.subr.mxu0 0.0
        %729 = vmatpush2.msra.mxu0 0.0
        %730 = vmatprep.subr.mxu0 0.0
        %731 = vmatpush2.msra.mxu0 0.0
        %732 = vmatprep.subr.mxu0 0.0
        %733 = vmatpush2.msra.mxu0 0.0
        %734 = vmatprep.subr.mxu0 0.0
        %735 = vmatpush2.msra.mxu0 0.0
        %736 = vmatprep.subr.mxu0 0.0
        %737 = vmatpush2.msra.mxu0 0.0
        %738 = vmatprep.subr.mxu0 0.0
        %739 = vmatpush2.msra.mxu0 0.0
        %740 = vmatprep.subr.mxu0 0.0
        %741 = vmatpush2.msra.mxu0 0.0
        %742 = vmatprep.subr.mxu0 0.0
        %743 = vmatpush2.msra.mxu0 0.0
        %744 = vmatprep.subr.mxu0 0.0
        %745 = vmatpush2.msra.mxu0 0.0
        %746 = vmatprep.mubr.f32.mxu0 0.0
        %747 = vmatmul.mubr.f32.gmra.mxu0 %v680
        %v748 = vpop.f32.mrf.mxu0
        %v749 = vadd.f32 0.0, %v748
        %v750 = vpop.f32.mrf.mxu0
        %751 = vdwg.mxu0
        %v753 = vsel %vm678, %v677, 0
        %755 = vmatprep.subr.mxu0 0.0
        %756 = vmatpush1.msra.mxu0 0.0
        %757 = vmatprep.subr.mxu0 0.0
        %758 = vmatpush1.msra.mxu0 0.0
        %759 = vmatprep.subr.mxu0 0.0
        %760 = vmatpush1.msra.mxu0 0.0
        %761 = vmatprep.subr.mxu0 0.0
        %762 = vmatpush1.msra.mxu0 0.0
        %763 = vmatprep.subr.mxu0 0.0
        %764 = vmatpush1.msra.mxu0 0.0
        %765 = vmatprep.subr.mxu0 0.0
        %766 = vmatpush1.msra.mxu0 0.0
        %767 = vmatprep.subr.mxu0 0.0
        %768 = vmatpush1.msra.mxu0 0.0
        %769 = vmatprep.subr.mxu0 0.0
        %770 = vmatpush1.msra.mxu0 0.0
        %771 = vmatprep.subr.mxu0 0.0
        %772 = vmatpush1.msra.mxu0 0.0
        %773 = vmatprep.subr.mxu0 0.0
        %774 = vmatpush1.msra.mxu0 0.0
        %775 = vmatprep.subr.mxu0 0.0
        %776 = vmatpush1.msra.mxu0 0.0
        %777 = vmatprep.subr.mxu0 0.0
        %778 = vmatpush1.msra.mxu0 0.0
        %779 = vmatprep.subr.mxu0 0.0
        %780 = vmatpush1.msra.mxu0 0.0
        %781 = vmatprep.subr.mxu0 0.0
        %782 = vmatpush1.msra.mxu0 0.0
        %783 = vmatprep.subr.mxu0 0.0
        %784 = vmatpush1.msra.mxu0 0.0
        %785 = vmatprep.subr.mxu0 0.0
        %786 = vmatpush1.msra.mxu0 %v516
        %787 = vmatprep.subr.mxu0 0.0
        %788 = vmatpush2.msra.mxu0 0.0
        %789 = vmatprep.subr.mxu0 0.0
        %790 = vmatpush2.msra.mxu0 0.0
        %791 = vmatprep.subr.mxu0 0.0
        %792 = vmatpush2.msra.mxu0 0.0
        %793 = vmatprep.subr.mxu0 0.0
        %794 = vmatpush2.msra.mxu0 0.0
        %795 = vmatprep.subr.mxu0 0.0
        %796 = vmatpush2.msra.mxu0 0.0
        %797 = vmatprep.subr.mxu0 0.0
        %798 = vmatpush2.msra.mxu0 0.0
        %799 = vmatprep.subr.mxu0 0.0
        %800 = vmatpush2.msra.mxu0 0.0
        %801 = vmatprep.subr.mxu0 0.0
        %802 = vmatpush2.msra.mxu0 0.0
        %803 = vmatprep.subr.mxu0 0.0
        %804 = vmatpush2.msra.mxu0 0.0
        %805 = vmatprep.subr.mxu0 0.0
        %806 = vmatpush2.msra.mxu0 0.0
        %807 = vmatprep.subr.mxu0 0.0
        %808 = vmatpush2.msra.mxu0 0.0
        %809 = vmatprep.subr.mxu0 0.0
        %810 = vmatpush2.msra.mxu0 0.0
        %811 = vmatprep.subr.mxu0 0.0
        %812 = vmatpush2.msra.mxu0 0.0
        %813 = vmatprep.subr.mxu0 0.0
        %814 = vmatpush2.msra.mxu0 0.0
        %815 = vmatprep.subr.mxu0 0.0
        %816 = vmatpush2.msra.mxu0 0.0
        %817 = vmatprep.subr.mxu0 0.0
        %818 = vmatpush2.msra.mxu0 0.0
        %819 = vmatprep.mubr.f32.mxu0 0.0
        %820 = vmatmul.mubr.f32.gmra.mxu0 %v753
        %v821 = vpop.f32.mrf.mxu0
        %v822 = vadd.f32 0.0, %v821
        %v823 = vpop.f32.mrf.mxu0
        %824 = vdwg.mxu0
        %825 = vst.msk [vmem:[#allocation3] sm:$0xff] %vm519, %v749
        %826 = vst.msk [vmem:[#allocation3 + $0x8] sm:$0xff] %vm519, %v822
        %827 = vmatprep.subr.mxu0 0.0
        %828 = vmatpush1.msra.mxu0 0.0
        %829 = vmatprep.subr.mxu0 0.0
        %830 = vmatpush1.msra.mxu0 0.0
        %831 = vmatprep.subr.mxu0 0.0
        %832 = vmatpush1.msra.mxu0 0.0
        %833 = vmatprep.subr.mxu0 0.0
        %834 = vmatpush1.msra.mxu0 0.0
        %835 = vmatprep.subr.mxu0 0.0
        %836 = vmatpush1.msra.mxu0 0.0
        %837 = vmatprep.subr.mxu0 0.0
        %838 = vmatpush1.msra.mxu0 0.0
        %839 = vmatprep.subr.mxu0 0.0
        %840 = vmatpush1.msra.mxu0 0.0
        %841 = vmatprep.subr.mxu0 0.0
        %842 = vmatpush1.msra.mxu0 0.0
        %843 = vmatprep.subr.mxu0 0.0
        %844 = vmatpush1.msra.mxu0 0.0
        %845 = vmatprep.subr.mxu0 0.0
        %846 = vmatpush1.msra.mxu0 0.0
        %847 = vmatprep.subr.mxu0 0.0
        %848 = vmatpush1.msra.mxu0 0.0
        %849 = vmatprep.subr.mxu0 0.0
        %850 = vmatpush1.msra.mxu0 0.0
        %851 = vmatprep.subr.mxu0 0.0
        %852 = vmatpush1.msra.mxu0 0.0
        %853 = vmatprep.subr.mxu0 0.0
        %854 = vmatpush1.msra.mxu0 0.0
        %855 = vmatprep.subr.mxu0 0.0
        %856 = vmatpush1.msra.mxu0 0.0
        %857 = vmatprep.subr.mxu0 0.0
        %858 = vmatpush1.msra.mxu0 %v517
        %859 = vmatprep.subr.mxu0 0.0
        %860 = vmatpush2.msra.mxu0 0.0
        %861 = vmatprep.subr.mxu0 0.0
        %862 = vmatpush2.msra.mxu0 0.0
        %863 = vmatprep.subr.mxu0 0.0
        %864 = vmatpush2.msra.mxu0 0.0
        %865 = vmatprep.subr.mxu0 0.0
        %866 = vmatpush2.msra.mxu0 0.0
        %867 = vmatprep.subr.mxu0 0.0
        %868 = vmatpush2.msra.mxu0 0.0
        %869 = vmatprep.subr.mxu0 0.0
        %870 = vmatpush2.msra.mxu0 0.0
        %871 = vmatprep.subr.mxu0 0.0
        %872 = vmatpush2.msra.mxu0 0.0
        %873 = vmatprep.subr.mxu0 0.0
        %874 = vmatpush2.msra.mxu0 0.0
        %875 = vmatprep.subr.mxu0 0.0
        %876 = vmatpush2.msra.mxu0 0.0
        %877 = vmatprep.subr.mxu0 0.0
        %878 = vmatpush2.msra.mxu0 0.0
        %879 = vmatprep.subr.mxu0 0.0
        %880 = vmatpush2.msra.mxu0 0.0
        %881 = vmatprep.subr.mxu0 0.0
        %882 = vmatpush2.msra.mxu0 0.0
        %883 = vmatprep.subr.mxu0 0.0
        %884 = vmatpush2.msra.mxu0 0.0
        %885 = vmatprep.subr.mxu0 0.0
        %886 = vmatpush2.msra.mxu0 0.0
        %887 = vmatprep.subr.mxu0 0.0
        %888 = vmatpush2.msra.mxu0 0.0
        %889 = vmatprep.subr.mxu0 0.0
        %890 = vmatpush2.msra.mxu0 0.0
        %891 = vmatprep.mubr.f32.mxu0 0.0
        %892 = vmatmul.mubr.f32.gmra.mxu0 %v680
        %v893 = vpop.f32.mrf.mxu0
        %v894 = vadd.f32 0.0, %v893
        %v895 = vpop.f32.mrf.mxu0
        %896 = vdwg.mxu0
        %897 = vmatprep.subr.mxu0 0.0
        %898 = vmatpush1.msra.mxu0 0.0
        %899 = vmatprep.subr.mxu0 0.0
        %900 = vmatpush1.msra.mxu0 0.0
        %901 = vmatprep.subr.mxu0 0.0
        %902 = vmatpush1.msra.mxu0 0.0
        %903 = vmatprep.subr.mxu0 0.0
        %904 = vmatpush1.msra.mxu0 0.0
        %905 = vmatprep.subr.mxu0 0.0
        %906 = vmatpush1.msra.mxu0 0.0
        %907 = vmatprep.subr.mxu0 0.0
        %908 = vmatpush1.msra.mxu0 0.0
        %909 = vmatprep.subr.mxu0 0.0
        %910 = vmatpush1.msra.mxu0 0.0
        %911 = vmatprep.subr.mxu0 0.0
        %912 = vmatpush1.msra.mxu0 0.0
        %913 = vmatprep.subr.mxu0 0.0
        %914 = vmatpush1.msra.mxu0 0.0
        %915 = vmatprep.subr.mxu0 0.0
        %916 = vmatpush1.msra.mxu0 0.0
        %917 = vmatprep.subr.mxu0 0.0
        %918 = vmatpush1.msra.mxu0 0.0
        %919 = vmatprep.subr.mxu0 0.0
        %920 = vmatpush1.msra.mxu0 0.0
        %921 = vmatprep.subr.mxu0 0.0
        %922 = vmatpush1.msra.mxu0 0.0
        %923 = vmatprep.subr.mxu0 0.0
        %924 = vmatpush1.msra.mxu0 0.0
        %925 = vmatprep.subr.mxu0 0.0
        %926 = vmatpush1.msra.mxu0 0.0
        %927 = vmatprep.subr.mxu0 0.0
        %928 = vmatpush1.msra.mxu0 %v518
        %929 = vmatprep.subr.mxu0 0.0
        %930 = vmatpush2.msra.mxu0 0.0
        %931 = vmatprep.subr.mxu0 0.0
        %932 = vmatpush2.msra.mxu0 0.0
        %933 = vmatprep.subr.mxu0 0.0
        %934 = vmatpush2.msra.mxu0 0.0
        %935 = vmatprep.subr.mxu0 0.0
        %936 = vmatpush2.msra.mxu0 0.0
        %937 = vmatprep.subr.mxu0 0.0
        %938 = vmatpush2.msra.mxu0 0.0
        %939 = vmatprep.subr.mxu0 0.0
        %940 = vmatpush2.msra.mxu0 0.0
        %941 = vmatprep.subr.mxu0 0.0
        %942 = vmatpush2.msra.mxu0 0.0
        %943 = vmatprep.subr.mxu0 0.0
        %944 = vmatpush2.msra.mxu0 0.0
        %945 = vmatprep.subr.mxu0 0.0
        %946 = vmatpush2.msra.mxu0 0.0
        %947 = vmatprep.subr.mxu0 0.0
        %948 = vmatpush2.msra.mxu0 0.0
        %949 = vmatprep.subr.mxu0 0.0
        %950 = vmatpush2.msra.mxu0 0.0
        %951 = vmatprep.subr.mxu0 0.0
        %952 = vmatpush2.msra.mxu0 0.0
        %953 = vmatprep.subr.mxu0 0.0
        %954 = vmatpush2.msra.mxu0 0.0
        %955 = vmatprep.subr.mxu0 0.0
        %956 = vmatpush2.msra.mxu0 0.0
        %957 = vmatprep.subr.mxu0 0.0
        %958 = vmatpush2.msra.mxu0 0.0
        %959 = vmatprep.subr.mxu0 0.0
        %960 = vmatpush2.msra.mxu0 0.0
        %961 = vmatprep.mubr.f32.mxu0 0.0
        %962 = vmatmul.mubr.f32.gmra.mxu0 %v753
        %v963 = vpop.f32.mrf.mxu0
        %v964 = vadd.f32 0.0, %v963
        %v965 = vpop.f32.mrf.mxu0
        %966 = vdwg.mxu0
        %967 = vst.msk [vmem:[#allocation4] sm:$0xff] %vm519, %v894
        %968 = vst.msk [vmem:[#allocation4 + $0x8] sm:$0xff] %vm519, %v964
        %v970 = vsel %vm519, %v495, 0
        %972 = vmatprep.subr.mxu0 0.0
        %973 = vmatpush1.xpose.msra.mxu0 0.0
        %974 = vmatprep.subr.mxu0 0.0
        %975 = vmatpush1.xpose.msra.mxu0 0.0
        %976 = vmatprep.subr.mxu0 0.0
        %977 = vmatpush1.xpose.msra.mxu0 0.0
        %978 = vmatprep.subr.mxu0 0.0
        %979 = vmatpush1.xpose.msra.mxu0 0.0
        %980 = vmatprep.subr.mxu0 0.0
        %981 = vmatpush1.xpose.msra.mxu0 0.0
        %982 = vmatprep.subr.mxu0 0.0
        %983 = vmatpush1.xpose.msra.mxu0 0.0
        %984 = vmatprep.subr.mxu0 0.0
        %985 = vmatpush1.xpose.msra.mxu0 0.0
        %986 = vmatprep.subr.mxu0 0.0
        %987 = vmatpush1.xpose.msra.mxu0 0.0
        %988 = vmatprep.subr.mxu0 0.0
        %989 = vmatpush1.xpose.msra.mxu0 0.0
        %990 = vmatprep.subr.mxu0 0.0
        %991 = vmatpush1.xpose.msra.mxu0 0.0
        %992 = vmatprep.subr.mxu0 0.0
        %993 = vmatpush1.xpose.msra.mxu0 0.0
        %994 = vmatprep.subr.mxu0 0.0
        %995 = vmatpush1.xpose.msra.mxu0 0.0
        %996 = vmatprep.subr.mxu0 0.0
        %997 = vmatpush1.xpose.msra.mxu0 0.0
        %998 = vmatprep.subr.mxu0 0.0
        %999 = vmatpush1.xpose.msra.mxu0 0.0
        %1000 = vmatprep.subr.mxu0 0.0
        %1001 = vmatpush1.xpose.msra.mxu0 0.0
        %1002 = vmatprep.subr.mxu0 0.0
        %1003 = vmatpush1.xpose.msra.mxu0 %v524
        %1004 = vmatprep.subr.mxu0 0.0
        %1005 = vmatpush2.xpose.msra.mxu0 0.0
        %1006 = vmatprep.subr.mxu0 0.0
        %1007 = vmatpush2.xpose.msra.mxu0 0.0
        %1008 = vmatprep.subr.mxu0 0.0
        %1009 = vmatpush2.xpose.msra.mxu0 0.0
        %1010 = vmatprep.subr.mxu0 0.0
        %1011 = vmatpush2.xpose.msra.mxu0 0.0
        %1012 = vmatprep.subr.mxu0 0.0
        %1013 = vmatpush2.xpose.msra.mxu0 0.0
        %1014 = vmatprep.subr.mxu0 0.0
        %1015 = vmatpush2.xpose.msra.mxu0 0.0
        %1016 = vmatprep.subr.mxu0 0.0
        %1017 = vmatpush2.xpose.msra.mxu0 0.0
        %1018 = vmatprep.subr.mxu0 0.0
        %1019 = vmatpush2.xpose.msra.mxu0 0.0
        %1020 = vmatprep.subr.mxu0 0.0
        %1021 = vmatpush2.xpose.msra.mxu0 0.0
        %1022 = vmatprep.subr.mxu0 0.0
        %1023 = vmatpush2.xpose.msra.mxu0 0.0
        %1024 = vmatprep.subr.mxu0 0.0
        %1025 = vmatpush2.xpose.msra.mxu0 0.0
        %1026 = vmatprep.subr.mxu0 0.0
        %1027 = vmatpush2.xpose.msra.mxu0 0.0
        %1028 = vmatprep.subr.mxu0 0.0
        %1029 = vmatpush2.xpose.msra.mxu0 0.0
        %1030 = vmatprep.subr.mxu0 0.0
        %1031 = vmatpush2.xpose.msra.mxu0 0.0
        %1032 = vmatprep.subr.mxu0 0.0
        %1033 = vmatpush2.xpose.msra.mxu0 0.0
        %1034 = vmatprep.subr.mxu0 0.0
        %1035 = vmatpush2.xpose.msra.mxu0 0.0
        %1036 = vmatprep.mubr.f32.mxu0 0.0
        %1037 = vmatmul.mubr.f32.gmra.mxu0 %v970
        %v1038 = vpop.f32.mrf.mxu0
        %v1039 = vadd.f32 0.0, %v1038
        %v1040 = vpop.f32.mrf.mxu0
        %1041 = vdwg.mxu0
        %v1043 = vsel %vm519, %v496, 0
        %1045 = vmatprep.subr.mxu0 0.0
        %1046 = vmatpush1.xpose.msra.mxu0 0.0
        %1047 = vmatprep.subr.mxu0 0.0
        %1048 = vmatpush1.xpose.msra.mxu0 0.0
        %1049 = vmatprep.subr.mxu0 0.0
        %1050 = vmatpush1.xpose.msra.mxu0 0.0
        %1051 = vmatprep.subr.mxu0 0.0
        %1052 = vmatpush1.xpose.msra.mxu0 0.0
        %1053 = vmatprep.subr.mxu0 0.0
        %1054 = vmatpush1.xpose.msra.mxu0 0.0
        %1055 = vmatprep.subr.mxu0 0.0
        %1056 = vmatpush1.xpose.msra.mxu0 0.0
        %1057 = vmatprep.subr.mxu0 0.0
        %1058 = vmatpush1.xpose.msra.mxu0 0.0
        %1059 = vmatprep.subr.mxu0 0.0
        %1060 = vmatpush1.xpose.msra.mxu0 0.0
        %1061 = vmatprep.subr.mxu0 0.0
        %1062 = vmatpush1.xpose.msra.mxu0 0.0
        %1063 = vmatprep.subr.mxu0 0.0
        %1064 = vmatpush1.xpose.msra.mxu0 0.0
        %1065 = vmatprep.subr.mxu0 0.0
        %1066 = vmatpush1.xpose.msra.mxu0 0.0
        %1067 = vmatprep.subr.mxu0 0.0
        %1068 = vmatpush1.xpose.msra.mxu0 0.0
        %1069 = vmatprep.subr.mxu0 0.0
        %1070 = vmatpush1.xpose.msra.mxu0 0.0
        %1071 = vmatprep.subr.mxu0 0.0
        %1072 = vmatpush1.xpose.msra.mxu0 0.0
        %1073 = vmatprep.subr.mxu0 0.0
        %1074 = vmatpush1.xpose.msra.mxu0 0.0
        %1075 = vmatprep.subr.mxu0 0.0
        %1076 = vmatpush1.xpose.msra.mxu0 %v600
        %1077 = vmatprep.subr.mxu0 0.0
        %1078 = vmatpush2.xpose.msra.mxu0 0.0
        %1079 = vmatprep.subr.mxu0 0.0
        %1080 = vmatpush2.xpose.msra.mxu0 0.0
        %1081 = vmatprep.subr.mxu0 0.0
        %1082 = vmatpush2.xpose.msra.mxu0 0.0
        %1083 = vmatprep.subr.mxu0 0.0
        %1084 = vmatpush2.xpose.msra.mxu0 0.0
        %1085 = vmatprep.subr.mxu0 0.0
        %1086 = vmatpush2.xpose.msra.mxu0 0.0
        %1087 = vmatprep.subr.mxu0 0.0
        %1088 = vmatpush2.xpose.msra.mxu0 0.0
        %1089 = vmatprep.subr.mxu0 0.0
        %1090 = vmatpush2.xpose.msra.mxu0 0.0
        %1091 = vmatprep.subr.mxu0 0.0
        %1092 = vmatpush2.xpose.msra.mxu0 0.0
        %1093 = vmatprep.subr.mxu0 0.0
        %1094 = vmatpush2.xpose.msra.mxu0 0.0
        %1095 = vmatprep.subr.mxu0 0.0
        %1096 = vmatpush2.xpose.msra.mxu0 0.0
        %1097 = vmatprep.subr.mxu0 0.0
        %1098 = vmatpush2.xpose.msra.mxu0 0.0
        %1099 = vmatprep.subr.mxu0 0.0
        %1100 = vmatpush2.xpose.msra.mxu0 0.0
        %1101 = vmatprep.subr.mxu0 0.0
        %1102 = vmatpush2.xpose.msra.mxu0 0.0
        %1103 = vmatprep.subr.mxu0 0.0
        %1104 = vmatpush2.xpose.msra.mxu0 0.0
        %1105 = vmatprep.subr.mxu0 0.0
        %1106 = vmatpush2.xpose.msra.mxu0 0.0
        %1107 = vmatprep.subr.mxu0 0.0
        %1108 = vmatpush2.xpose.msra.mxu0 0.0
        %1109 = vmatprep.mubr.f32.mxu0 0.0
        %1110 = vmatmul.mubr.f32.gmra.mxu0 %v1043
        %v1111 = vpop.f32.mrf.mxu0
        %v1112 = vadd.f32 0.0, %v1111
        %v1113 = vpop.f32.mrf.mxu0
        %1114 = vdwg.mxu0
        %v1115 = vsel %vm488, 1, 0
        %vm1116 = vcmp.eq.s32.totalorder %v1115, 1
        %v1117 = vsel %vm1116, %v1039, 0.0
        %v1118 = vsel %vm1116, %v1112, 0.0
        %1119 = vst.msk [vmem:[#allocation5] sm:$0xff] %vm678, %v1117
        %1120 = vst.msk [vmem:[#allocation5 + $0x8] sm:$0xff] %vm678, %v1118
        %v1121 = vld [vmem:[#allocation2] sm:$0xff]
        %v1122 = vld [vmem:[#allocation2 + $0x8] sm:$0xff]
        %v1123 = vld [vmem:[#allocation2 + $0x10] sm:$0xff]
        %v1124 = vld [vmem:[#allocation2 + $0x18] sm:$0xff]
        %v1125 = vld [vmem:[#allocation3] sm:$0xff]
        %v1126 = vld [vmem:[#allocation4] sm:$0xff]
        %v1127 = vld [vmem:[#allocation5] sm:$0xff]
        %v1128 = vld [vmem:[%s375] sm:$0xff]
        %v1129 = vmax.f32 %v1128, -10000.0
        %v1130 = vmin.f32 %v1129, 10000.0
        %v1131 = vld [vmem:[%s384] sm:$0xff]
        %v1132 = vmax.f32 %v1131, -10000.0
        %v1133 = vmin.f32 %v1132, 10000.0
        %v1135 = vsel %vm519, %v1125, 0
        %1137 = vmatprep.subr.mxu0 0.0
        %1138 = vmatpush1.msra.mxu0 0.0
        %1139 = vmatprep.subr.mxu0 0.0
        %1140 = vmatpush1.msra.mxu0 0.0
        %1141 = vmatprep.subr.mxu0 0.0
        %1142 = vmatpush1.msra.mxu0 0.0
        %1143 = vmatprep.subr.mxu0 0.0
        %1144 = vmatpush1.msra.mxu0 0.0
        %1145 = vmatprep.subr.mxu0 0.0
        %1146 = vmatpush1.msra.mxu0 0.0
        %1147 = vmatprep.subr.mxu0 0.0
        %1148 = vmatpush1.msra.mxu0 0.0
        %1149 = vmatprep.subr.mxu0 0.0
        %1150 = vmatpush1.msra.mxu0 0.0
        %1151 = vmatprep.subr.mxu0 0.0
        %1152 = vmatpush1.msra.mxu0 0.0
        %1153 = vmatprep.subr.mxu0 0.0
        %1154 = vmatpush1.msra.mxu0 0.0
        %1155 = vmatprep.subr.mxu0 0.0
        %1156 = vmatpush1.msra.mxu0 0.0
        %1157 = vmatprep.subr.mxu0 0.0
        %1158 = vmatpush1.msra.mxu0 0.0
        %1159 = vmatprep.subr.mxu0 0.0
        %1160 = vmatpush1.msra.mxu0 0.0
        %1161 = vmatprep.subr.mxu0 0.0
        %1162 = vmatpush1.msra.mxu0 %v1124
        %1163 = vmatprep.subr.mxu0 0.0
        %1164 = vmatpush1.msra.mxu0 %v1123
        %1165 = vmatprep.subr.mxu0 0.0
        %1166 = vmatpush1.msra.mxu0 %v1122
        %1167 = vmatprep.subr.mxu0 0.0
        %1168 = vmatpush1.msra.mxu0 %v1121
        %1169 = vmatprep.subr.mxu0 0.0
        %1170 = vmatpush2.msra.mxu0 0.0
        %1171 = vmatprep.subr.mxu0 0.0
        %1172 = vmatpush2.msra.mxu0 0.0
        %1173 = vmatprep.subr.mxu0 0.0
        %1174 = vmatpush2.msra.mxu0 0.0
        %1175 = vmatprep.subr.mxu0 0.0
        %1176 = vmatpush2.msra.mxu0 0.0
        %1177 = vmatprep.subr.mxu0 0.0
        %1178 = vmatpush2.msra.mxu0 0.0
        %1179 = vmatprep.subr.mxu0 0.0
        %1180 = vmatpush2.msra.mxu0 0.0
        %1181 = vmatprep.subr.mxu0 0.0
        %1182 = vmatpush2.msra.mxu0 0.0
        %1183 = vmatprep.subr.mxu0 0.0
        %1184 = vmatpush2.msra.mxu0 0.0
        %1185 = vmatprep.subr.mxu0 0.0
        %1186 = vmatpush2.msra.mxu0 0.0
        %1187 = vmatprep.subr.mxu0 0.0
        %1188 = vmatpush2.msra.mxu0 0.0
        %1189 = vmatprep.subr.mxu0 0.0
        %1190 = vmatpush2.msra.mxu0 0.0
        %1191 = vmatprep.subr.mxu0 0.0
        %1192 = vmatpush2.msra.mxu0 0.0
        %1193 = vmatprep.subr.mxu0 0.0
        %1194 = vmatpush2.msra.mxu0 0.0
        %1195 = vmatprep.subr.mxu0 0.0
        %1196 = vmatpush2.msra.mxu0 0.0
        %1197 = vmatprep.subr.mxu0 0.0
        %1198 = vmatpush2.msra.mxu0 0.0
        %1199 = vmatprep.subr.mxu0 0.0
        %1200 = vmatpush2.msra.mxu0 0.0
        %1201 = vmatprep.mubr.f32.mxu0 0.0
        %1202 = vmatmul.mubr.f32.gmra.mxu0 %v1135
        %v1203 = vpop.f32.mrf.mxu0
        %v1204 = vadd.f32 0.0, %v1203
        %v1205 = vpop.f32.mrf.mxu0
        %1206 = vdwg.mxu0
        %v1207 = vsub.f32 %v1126, %v1204
        %v1209 = vsel %vm519, %v1130, 0
        %1211 = vmatprep.subr.mxu0 0.0
        %1212 = vmatpush1.msra.mxu0 0.0
        %1213 = vmatprep.subr.mxu0 0.0
        %1214 = vmatpush1.msra.mxu0 0.0
        %1215 = vmatprep.subr.mxu0 0.0
        %1216 = vmatpush1.msra.mxu0 0.0
        %1217 = vmatprep.subr.mxu0 0.0
        %1218 = vmatpush1.msra.mxu0 0.0
        %1219 = vmatprep.subr.mxu0 0.0
        %1220 = vmatpush1.msra.mxu0 0.0
        %1221 = vmatprep.subr.mxu0 0.0
        %1222 = vmatpush1.msra.mxu0 0.0
        %1223 = vmatprep.subr.mxu0 0.0
        %1224 = vmatpush1.msra.mxu0 0.0
        %1225 = vmatprep.subr.mxu0 0.0
        %1226 = vmatpush1.msra.mxu0 0.0
        %1227 = vmatprep.subr.mxu0 0.0
        %1228 = vmatpush1.msra.mxu0 0.0
        %1229 = vmatprep.subr.mxu0 0.0
        %1230 = vmatpush1.msra.mxu0 0.0
        %1231 = vmatprep.subr.mxu0 0.0
        %1232 = vmatpush1.msra.mxu0 0.0
        %1233 = vmatprep.subr.mxu0 0.0
        %1234 = vmatpush1.msra.mxu0 0.0
        %1235 = vmatprep.subr.mxu0 0.0
        %1236 = vmatpush1.msra.mxu0 %v1124
        %1237 = vmatprep.subr.mxu0 0.0
        %1238 = vmatpush1.msra.mxu0 %v1123
        %1239 = vmatprep.subr.mxu0 0.0
        %1240 = vmatpush1.msra.mxu0 %v1122
        %1241 = vmatprep.subr.mxu0 0.0
        %1242 = vmatpush1.msra.mxu0 %v1121
        %1243 = vmatprep.subr.mxu0 0.0
        %1244 = vmatpush2.msra.mxu0 0.0
        %1245 = vmatprep.subr.mxu0 0.0
        %1246 = vmatpush2.msra.mxu0 0.0
        %1247 = vmatprep.subr.mxu0 0.0
        %1248 = vmatpush2.msra.mxu0 0.0
        %1249 = vmatprep.subr.mxu0 0.0
        %1250 = vmatpush2.msra.mxu0 0.0
        %1251 = vmatprep.subr.mxu0 0.0
        %1252 = vmatpush2.msra.mxu0 0.0
        %1253 = vmatprep.subr.mxu0 0.0
        %1254 = vmatpush2.msra.mxu0 0.0
        %1255 = vmatprep.subr.mxu0 0.0
        %1256 = vmatpush2.msra.mxu0 0.0
        %1257 = vmatprep.subr.mxu0 0.0
        %1258 = vmatpush2.msra.mxu0 0.0
        %1259 = vmatprep.subr.mxu0 0.0
        %1260 = vmatpush2.msra.mxu0 0.0
        %1261 = vmatprep.subr.mxu0 0.0
        %1262 = vmatpush2.msra.mxu0 0.0
        %1263 = vmatprep.subr.mxu0 0.0
        %1264 = vmatpush2.msra.mxu0 0.0
        %1265 = vmatprep.subr.mxu0 0.0
        %1266 = vmatpush2.msra.mxu0 0.0
        %1267 = vmatprep.subr.mxu0 0.0
        %1268 = vmatpush2.msra.mxu0 0.0
        %1269 = vmatprep.subr.mxu0 0.0
        %1270 = vmatpush2.msra.mxu0 0.0
        %1271 = vmatprep.subr.mxu0 0.0
        %1272 = vmatpush2.msra.mxu0 0.0
        %1273 = vmatprep.subr.mxu0 0.0
        %1274 = vmatpush2.msra.mxu0 0.0
        %1275 = vmatprep.mubr.f32.mxu0 0.0
        %1276 = vmatmul.mubr.f32.gmra.mxu0 %v1209
        %v1277 = vpop.f32.mrf.mxu0
        %v1278 = vadd.f32 0.0, %v1277
        %v1279 = vpop.f32.mrf.mxu0
        %1280 = vdwg.mxu0
        %v1282 = vsel %vm678, %v1127, 0
        %1284 = vmatprep.subr.mxu0 0.0
        %1285 = vmatpush1.msra.mxu0 0.0
        %1286 = vmatprep.subr.mxu0 0.0
        %1287 = vmatpush1.msra.mxu0 0.0
        %1288 = vmatprep.subr.mxu0 0.0
        %1289 = vmatpush1.msra.mxu0 0.0
        %1290 = vmatprep.subr.mxu0 0.0
        %1291 = vmatpush1.msra.mxu0 0.0
        %1292 = vmatprep.subr.mxu0 0.0
        %1293 = vmatpush1.msra.mxu0 0.0
        %1294 = vmatprep.subr.mxu0 0.0
        %1295 = vmatpush1.msra.mxu0 0.0
        %1296 = vmatprep.subr.mxu0 0.0
        %1297 = vmatpush1.msra.mxu0 0.0
        %1298 = vmatprep.subr.mxu0 0.0
        %1299 = vmatpush1.msra.mxu0 0.0
        %1300 = vmatprep.subr.mxu0 0.0
        %1301 = vmatpush1.msra.mxu0 0.0
        %1302 = vmatprep.subr.mxu0 0.0
        %1303 = vmatpush1.msra.mxu0 0.0
        %1304 = vmatprep.subr.mxu0 0.0
        %1305 = vmatpush1.msra.mxu0 0.0
        %1306 = vmatprep.subr.mxu0 0.0
        %1307 = vmatpush1.msra.mxu0 0.0
        %1308 = vmatprep.subr.mxu0 0.0
        %1309 = vmatpush1.msra.mxu0 0.0
        %1310 = vmatprep.subr.mxu0 0.0
        %1311 = vmatpush1.msra.mxu0 0.0
        %1312 = vmatprep.subr.mxu0 0.0
        %1313 = vmatpush1.msra.mxu0 0.0
        %1314 = vmatprep.subr.mxu0 0.0
        %1315 = vmatpush1.msra.mxu0 %v1207
        %1316 = vmatprep.subr.mxu0 0.0
        %1317 = vmatpush2.msra.mxu0 0.0
        %1318 = vmatprep.subr.mxu0 0.0
        %1319 = vmatpush2.msra.mxu0 0.0
        %1320 = vmatprep.subr.mxu0 0.0
        %1321 = vmatpush2.msra.mxu0 0.0
        %1322 = vmatprep.subr.mxu0 0.0
        %1323 = vmatpush2.msra.mxu0 0.0
        %1324 = vmatprep.subr.mxu0 0.0
        %1325 = vmatpush2.msra.mxu0 0.0
        %1326 = vmatprep.subr.mxu0 0.0
        %1327 = vmatpush2.msra.mxu0 0.0
        %1328 = vmatprep.subr.mxu0 0.0
        %1329 = vmatpush2.msra.mxu0 0.0
        %1330 = vmatprep.subr.mxu0 0.0
        %1331 = vmatpush2.msra.mxu0 0.0
        %1332 = vmatprep.subr.mxu0 0.0
        %1333 = vmatpush2.msra.mxu0 0.0
        %1334 = vmatprep.subr.mxu0 0.0
        %1335 = vmatpush2.msra.mxu0 0.0
        %1336 = vmatprep.subr.mxu0 0.0
        %1337 = vmatpush2.msra.mxu0 0.0
        %1338 = vmatprep.subr.mxu0 0.0
        %1339 = vmatpush2.msra.mxu0 0.0
        %1340 = vmatprep.subr.mxu0 0.0
        %1341 = vmatpush2.msra.mxu0 0.0
        %1342 = vmatprep.subr.mxu0 0.0
        %1343 = vmatpush2.msra.mxu0 0.0
        %1344 = vmatprep.subr.mxu0 0.0
        %1345 = vmatpush2.msra.mxu0 0.0
        %1346 = vmatprep.subr.mxu0 0.0
        %1347 = vmatpush2.msra.mxu0 0.0
        %1348 = vmatprep.mubr.f32.mxu0 0.0
        %1349 = vmatmul.mubr.f32.gmra.mxu0 %v1282
        %v1350 = vpop.f32.mrf.mxu0
        %v1351 = vadd.f32 %v1278, %v1350
        %v1352 = vpop.f32.mrf.mxu0
        %1353 = vdwg.mxu0
        %1354 = vst.msk [vmem:[%s457] sm:$0xff] %vm519, %v1351
        %1355 = vxpose.xlu0.b32.start [1/16] %v1133, 128
        %1356 = vxpose.xlu0.b32.cont [2/16] 0.0, 128
        %1357 = vxpose.xlu0.b32.cont [3/16] 0.0, 128
        %1358 = vxpose.xlu0.b32.cont [4/16] 0.0, 128
        %1359 = vxpose.xlu0.b32.cont [5/16] 0.0, 128
        %1360 = vxpose.xlu0.b32.cont [6/16] 0.0, 128
        %1361 = vxpose.xlu0.b32.cont [7/16] 0.0, 128
        %1362 = vxpose.xlu0.b32.cont [8/16] 0.0, 128
        %1363 = vxpose.xlu0.b32.cont [9/16] 0.0, 128
        %1364 = vxpose.xlu0.b32.cont [10/16] 0.0, 128
        %1365 = vxpose.xlu0.b32.cont [11/16] 0.0, 128
        %1366 = vxpose.xlu0.b32.cont [12/16] 0.0, 128
        %1367 = vxpose.xlu0.b32.cont [13/16] 0.0, 128
        %1368 = vxpose.xlu0.b32.cont [14/16] 0.0, 128
        %1369 = vxpose.xlu0.b32.cont [15/16] 0.0, 128
        %1370 = vxpose.xlu0.b32.end [16/16] 0.0, 128
        %v1371 = vpop.trf.xlu0
        %v1372 = vpop.trf.xlu0
        %v1373 = vpop.trf.xlu0
        %v1374 = vpop.trf.xlu0
        %v1375 = vpop.trf.xlu0
        %v1376 = vpop.trf.xlu0
        %v1377 = vpop.trf.xlu0
        %v1378 = vpop.trf.xlu0
        %v1379 = vpop.trf.xlu0
        %v1380 = vpop.trf.xlu0
        %v1381 = vpop.trf.xlu0
        %v1382 = vpop.trf.xlu0
        %v1383 = vpop.trf.xlu0
        %v1384 = vpop.trf.xlu0
        %v1385 = vpop.trf.xlu0
        %v1386 = vpop.trf.xlu0
        %v1388 = vsel %vm678, %v1371, 0
        %v1391 = vsel %vm678, %v1372, 0
        %v1394 = vsel %vm678, %v1373, 0
        %v1397 = vsel %vm678, %v1374, 0
        %1399 = vmatprep.subr.mxu0 0.0
        %1400 = vmatpush1.msra.mxu0 0.0
        %1401 = vmatprep.subr.mxu0 0.0
        %1402 = vmatpush1.msra.mxu0 0.0
        %1403 = vmatprep.subr.mxu0 0.0
        %1404 = vmatpush1.msra.mxu0 0.0
        %1405 = vmatprep.subr.mxu0 0.0
        %1406 = vmatpush1.msra.mxu0 0.0
        %1407 = vmatprep.subr.mxu0 0.0
        %1408 = vmatpush1.msra.mxu0 0.0
        %1409 = vmatprep.subr.mxu0 0.0
        %1410 = vmatpush1.msra.mxu0 0.0
        %1411 = vmatprep.subr.mxu0 0.0
        %1412 = vmatpush1.msra.mxu0 0.0
        %1413 = vmatprep.subr.mxu0 0.0
        %1414 = vmatpush1.msra.mxu0 0.0
        %1415 = vmatprep.subr.mxu0 0.0
        %1416 = vmatpush1.msra.mxu0 0.0
        %1417 = vmatprep.subr.mxu0 0.0
        %1418 = vmatpush1.msra.mxu0 0.0
        %1419 = vmatprep.subr.mxu0 0.0
        %1420 = vmatpush1.msra.mxu0 0.0
        %1421 = vmatprep.subr.mxu0 0.0
        %1422 = vmatpush1.msra.mxu0 0.0
        %1423 = vmatprep.subr.mxu0 0.0
        %1424 = vmatpush1.msra.mxu0 0.0
        %1425 = vmatprep.subr.mxu0 0.0
        %1426 = vmatpush1.msra.mxu0 0.0
        %1427 = vmatprep.subr.mxu0 0.0
        %1428 = vmatpush1.msra.mxu0 0.0
        %1429 = vmatprep.subr.mxu0 0.0
        %1430 = vmatpush1.msra.mxu0 %v1207
        %1431 = vmatprep.subr.mxu0 0.0
        %1432 = vmatpush2.msra.mxu0 0.0
        %1433 = vmatprep.subr.mxu0 0.0
        %1434 = vmatpush2.msra.mxu0 0.0
        %1435 = vmatprep.subr.mxu0 0.0
        %1436 = vmatpush2.msra.mxu0 0.0
        %1437 = vmatprep.subr.mxu0 0.0
        %1438 = vmatpush2.msra.mxu0 0.0
        %1439 = vmatprep.subr.mxu0 0.0
        %1440 = vmatpush2.msra.mxu0 0.0
        %1441 = vmatprep.subr.mxu0 0.0
        %1442 = vmatpush2.msra.mxu0 0.0
        %1443 = vmatprep.subr.mxu0 0.0
        %1444 = vmatpush2.msra.mxu0 0.0
        %1445 = vmatprep.subr.mxu0 0.0
        %1446 = vmatpush2.msra.mxu0 0.0
        %1447 = vmatprep.subr.mxu0 0.0
        %1448 = vmatpush2.msra.mxu0 0.0
        %1449 = vmatprep.subr.mxu0 0.0
        %1450 = vmatpush2.msra.mxu0 0.0
        %1451 = vmatprep.subr.mxu0 0.0
        %1452 = vmatpush2.msra.mxu0 0.0
        %1453 = vmatprep.subr.mxu0 0.0
        %1454 = vmatpush2.msra.mxu0 0.0
        %1455 = vmatprep.subr.mxu0 0.0
        %1456 = vmatpush2.msra.mxu0 0.0
        %1457 = vmatprep.subr.mxu0 0.0
        %1458 = vmatpush2.msra.mxu0 0.0
        %1459 = vmatprep.subr.mxu0 0.0
        %1460 = vmatpush2.msra.mxu0 0.0
        %1461 = vmatprep.subr.mxu0 0.0
        %1462 = vmatpush2.msra.mxu0 0.0
        %1463 = vmatprep.mubr.f32.mxu0 0.0
        %1464 = vmatmul.mubr.f32.gmra.mxu0 %v1388
        %v1465 = vpop.f32.mrf.mxu0
        %v1466 = vadd.f32 0.0, %v1465
        %v1467 = vpop.f32.mrf.mxu0
        %1468 = vmatprep.mubr.f32.mxu0 0.0
        %1469 = vmatmul.mubr.f32.gmra.mxu0 %v1391
        %v1470 = vpop.f32.mrf.mxu0
        %v1471 = vadd.f32 0.0, %v1470
        %v1472 = vpop.f32.mrf.mxu0
        %1473 = vmatprep.mubr.f32.mxu0 0.0
        %1474 = vmatmul.mubr.f32.gmra.mxu0 %v1394
        %v1475 = vpop.f32.mrf.mxu0
        %v1476 = vadd.f32 0.0, %v1475
        %v1477 = vpop.f32.mrf.mxu0
        %1478 = vmatprep.mubr.f32.mxu0 0.0
        %1479 = vmatmul.mubr.f32.gmra.mxu0 %v1397
        %v1480 = vpop.f32.mrf.mxu0
        %v1481 = vadd.f32 0.0, %v1480
        %v1482 = vpop.f32.mrf.mxu0
        %1483 = vdwg.mxu0
        %v1484 = vadd.f32 %v1121, %v1466
        %v1485 = vadd.f32 %v1122, %v1471
        %v1486 = vadd.f32 %v1123, %v1476
        %v1487 = vadd.f32 %v1124, %v1481
        %s1488 = scalar_lea.vmem [#allocation3], 8
        %v1489 = vld [vmem:[%s1488] sm:$0xff]
        %s1490 = scalar_lea.vmem [#allocation4], 8
        %v1491 = vld [vmem:[%s1490] sm:$0xff]
        %s1492 = scalar_lea.vmem [#allocation5], 8
        %v1493 = vld [vmem:[%s1492] sm:$0xff]
        %s1494 = scalar_lea.vmem %s375, 8 [#allocation6]
        %v1495 = vld [vmem:[%s1494] sm:$0xff]
        %v1496 = vmax.f32 %v1495, -10000.0
        %v1497 = vmin.f32 %v1496, 10000.0
        %s1498 = scalar_lea.vmem %s384, 8 [#allocation9]
        %v1499 = vld [vmem:[%s1498] sm:$0xff]
        %v1500 = vmax.f32 %v1499, -10000.0
        %v1501 = vmin.f32 %v1500, 10000.0
        %v1503 = vsel %vm519, %v1489, 0
        %1505 = vmatprep.subr.mxu0 0.0
        %1506 = vmatpush1.msra.mxu0 0.0
        %1507 = vmatprep.subr.mxu0 0.0
        %1508 = vmatpush1.msra.mxu0 0.0
        %1509 = vmatprep.subr.mxu0 0.0
        %1510 = vmatpush1.msra.mxu0 0.0
        %1511 = vmatprep.subr.mxu0 0.0
        %1512 = vmatpush1.msra.mxu0 0.0
        %1513 = vmatprep.subr.mxu0 0.0
        %1514 = vmatpush1.msra.mxu0 0.0
        %1515 = vmatprep.subr.mxu0 0.0
        %1516 = vmatpush1.msra.mxu0 0.0
        %1517 = vmatprep.subr.mxu0 0.0
        %1518 = vmatpush1.msra.mxu0 0.0
        %1519 = vmatprep.subr.mxu0 0.0
        %1520 = vmatpush1.msra.mxu0 0.0
        %1521 = vmatprep.subr.mxu0 0.0
        %1522 = vmatpush1.msra.mxu0 0.0
        %1523 = vmatprep.subr.mxu0 0.0
        %1524 = vmatpush1.msra.mxu0 0.0
        %1525 = vmatprep.subr.mxu0 0.0
        %1526 = vmatpush1.msra.mxu0 0.0
        %1527 = vmatprep.subr.mxu0 0.0
        %1528 = vmatpush1.msra.mxu0 0.0
        %1529 = vmatprep.subr.mxu0 0.0
        %1530 = vmatpush1.msra.mxu0 %v1487
        %1531 = vmatprep.subr.mxu0 0.0
        %1532 = vmatpush1.msra.mxu0 %v1486
        %1533 = vmatprep.subr.mxu0 0.0
        %1534 = vmatpush1.msra.mxu0 %v1485
        %1535 = vmatprep.subr.mxu0 0.0
        %1536 = vmatpush1.msra.mxu0 %v1484
        %1537 = vmatprep.subr.mxu0 0.0
        %1538 = vmatpush2.msra.mxu0 0.0
        %1539 = vmatprep.subr.mxu0 0.0
        %1540 = vmatpush2.msra.mxu0 0.0
        %1541 = vmatprep.subr.mxu0 0.0
        %1542 = vmatpush2.msra.mxu0 0.0
        %1543 = vmatprep.subr.mxu0 0.0
        %1544 = vmatpush2.msra.mxu0 0.0
        %1545 = vmatprep.subr.mxu0 0.0
        %1546 = vmatpush2.msra.mxu0 0.0
        %1547 = vmatprep.subr.mxu0 0.0
        %1548 = vmatpush2.msra.mxu0 0.0
        %1549 = vmatprep.subr.mxu0 0.0
        %1550 = vmatpush2.msra.mxu0 0.0
        %1551 = vmatprep.subr.mxu0 0.0
        %1552 = vmatpush2.msra.mxu0 0.0
        %1553 = vmatprep.subr.mxu0 0.0
        %1554 = vmatpush2.msra.mxu0 0.0
        %1555 = vmatprep.subr.mxu0 0.0
        %1556 = vmatpush2.msra.mxu0 0.0
        %1557 = vmatprep.subr.mxu0 0.0
        %1558 = vmatpush2.msra.mxu0 0.0
        %1559 = vmatprep.subr.mxu0 0.0
        %1560 = vmatpush2.msra.mxu0 0.0
        %1561 = vmatprep.subr.mxu0 0.0
        %1562 = vmatpush2.msra.mxu0 0.0
        %1563 = vmatprep.subr.mxu0 0.0
        %1564 = vmatpush2.msra.mxu0 0.0
        %1565 = vmatprep.subr.mxu0 0.0
        %1566 = vmatpush2.msra.mxu0 0.0
        %1567 = vmatprep.subr.mxu0 0.0
        %1568 = vmatpush2.msra.mxu0 0.0
        %1569 = vmatprep.mubr.f32.mxu0 0.0
        %1570 = vmatmul.mubr.f32.gmra.mxu0 %v1503
        %v1571 = vpop.f32.mrf.mxu0
        %v1572 = vadd.f32 0.0, %v1571
        %v1573 = vpop.f32.mrf.mxu0
        %1574 = vdwg.mxu0
        %v1575 = vsub.f32 %v1491, %v1572
        %v1577 = vsel %vm519, %v1497, 0
        %1579 = vmatprep.subr.mxu0 0.0
        %1580 = vmatpush1.msra.mxu0 0.0
        %1581 = vmatprep.subr.mxu0 0.0
        %1582 = vmatpush1.msra.mxu0 0.0
        %1583 = vmatprep.subr.mxu0 0.0
        %1584 = vmatpush1.msra.mxu0 0.0
        %1585 = vmatprep.subr.mxu0 0.0
        %1586 = vmatpush1.msra.mxu0 0.0
        %1587 = vmatprep.subr.mxu0 0.0
        %1588 = vmatpush1.msra.mxu0 0.0
        %1589 = vmatprep.subr.mxu0 0.0
        %1590 = vmatpush1.msra.mxu0 0.0
        %1591 = vmatprep.subr.mxu0 0.0
        %1592 = vmatpush1.msra.mxu0 0.0
        %1593 = vmatprep.subr.mxu0 0.0
        %1594 = vmatpush1.msra.mxu0 0.0
        %1595 = vmatprep.subr.mxu0 0.0
        %1596 = vmatpush1.msra.mxu0 0.0
        %1597 = vmatprep.subr.mxu0 0.0
        %1598 = vmatpush1.msra.mxu0 0.0
        %1599 = vmatprep.subr.mxu0 0.0
        %1600 = vmatpush1.msra.mxu0 0.0
        %1601 = vmatprep.subr.mxu0 0.0
        %1602 = vmatpush1.msra.mxu0 0.0
        %1603 = vmatprep.subr.mxu0 0.0
        %1604 = vmatpush1.msra.mxu0 %v1487
        %1605 = vmatprep.subr.mxu0 0.0
        %1606 = vmatpush1.msra.mxu0 %v1486
        %1607 = vmatprep.subr.mxu0 0.0
        %1608 = vmatpush1.msra.mxu0 %v1485
        %1609 = vmatprep.subr.mxu0 0.0
        %1610 = vmatpush1.msra.mxu0 %v1484
        %1611 = vmatprep.subr.mxu0 0.0
        %1612 = vmatpush2.msra.mxu0 0.0
        %1613 = vmatprep.subr.mxu0 0.0
        %1614 = vmatpush2.msra.mxu0 0.0
        %1615 = vmatprep.subr.mxu0 0.0
        %1616 = vmatpush2.msra.mxu0 0.0
        %1617 = vmatprep.subr.mxu0 0.0
        %1618 = vmatpush2.msra.mxu0 0.0
        %1619 = vmatprep.subr.mxu0 0.0
        %1620 = vmatpush2.msra.mxu0 0.0
        %1621 = vmatprep.subr.mxu0 0.0
        %1622 = vmatpush2.msra.mxu0 0.0
        %1623 = vmatprep.subr.mxu0 0.0
        %1624 = vmatpush2.msra.mxu0 0.0
        %1625 = vmatprep.subr.mxu0 0.0
        %1626 = vmatpush2.msra.mxu0 0.0
        %1627 = vmatprep.subr.mxu0 0.0
        %1628 = vmatpush2.msra.mxu0 0.0
        %1629 = vmatprep.subr.mxu0 0.0
        %1630 = vmatpush2.msra.mxu0 0.0
        %1631 = vmatprep.subr.mxu0 0.0
        %1632 = vmatpush2.msra.mxu0 0.0
        %1633 = vmatprep.subr.mxu0 0.0
        %1634 = vmatpush2.msra.mxu0 0.0
        %1635 = vmatprep.subr.mxu0 0.0
        %1636 = vmatpush2.msra.mxu0 0.0
        %1637 = vmatprep.subr.mxu0 0.0
        %1638 = vmatpush2.msra.mxu0 0.0
        %1639 = vmatprep.subr.mxu0 0.0
        %1640 = vmatpush2.msra.mxu0 0.0
        %1641 = vmatprep.subr.mxu0 0.0
        %1642 = vmatpush2.msra.mxu0 0.0
        %1643 = vmatprep.mubr.f32.mxu0 0.0
        %1644 = vmatmul.mubr.f32.gmra.mxu0 %v1577
        %v1645 = vpop.f32.mrf.mxu0
        %v1646 = vadd.f32 0.0, %v1645
        %v1647 = vpop.f32.mrf.mxu0
        %1648 = vdwg.mxu0
        %v1650 = vsel %vm678, %v1493, 0
        %1652 = vmatprep.subr.mxu0 0.0
        %1653 = vmatpush1.msra.mxu0 0.0
        %1654 = vmatprep.subr.mxu0 0.0
        %1655 = vmatpush1.msra.mxu0 0.0
        %1656 = vmatprep.subr.mxu0 0.0
        %1657 = vmatpush1.msra.mxu0 0.0
        %1658 = vmatprep.subr.mxu0 0.0
        %1659 = vmatpush1.msra.mxu0 0.0
        %1660 = vmatprep.subr.mxu0 0.0
        %1661 = vmatpush1.msra.mxu0 0.0
        %1662 = vmatprep.subr.mxu0 0.0
        %1663 = vmatpush1.msra.mxu0 0.0
        %1664 = vmatprep.subr.mxu0 0.0
        %1665 = vmatpush1.msra.mxu0 0.0
        %1666 = vmatprep.subr.mxu0 0.0
        %1667 = vmatpush1.msra.mxu0 0.0
        %1668 = vmatprep.subr.mxu0 0.0
        %1669 = vmatpush1.msra.mxu0 0.0
        %1670 = vmatprep.subr.mxu0 0.0
        %1671 = vmatpush1.msra.mxu0 0.0
        %1672 = vmatprep.subr.mxu0 0.0
        %1673 = vmatpush1.msra.mxu0 0.0
        %1674 = vmatprep.subr.mxu0 0.0
        %1675 = vmatpush1.msra.mxu0 0.0
        %1676 = vmatprep.subr.mxu0 0.0
        %1677 = vmatpush1.msra.mxu0 0.0
        %1678 = vmatprep.subr.mxu0 0.0
        %1679 = vmatpush1.msra.mxu0 0.0
        %1680 = vmatprep.subr.mxu0 0.0
        %1681 = vmatpush1.msra.mxu0 0.0
        %1682 = vmatprep.subr.mxu0 0.0
        %1683 = vmatpush1.msra.mxu0 %v1575
        %1684 = vmatprep.subr.mxu0 0.0
        %1685 = vmatpush2.msra.mxu0 0.0
        %1686 = vmatprep.subr.mxu0 0.0
        %1687 = vmatpush2.msra.mxu0 0.0
        %1688 = vmatprep.subr.mxu0 0.0
        %1689 = vmatpush2.msra.mxu0 0.0
        %1690 = vmatprep.subr.mxu0 0.0
        %1691 = vmatpush2.msra.mxu0 0.0
        %1692 = vmatprep.subr.mxu0 0.0
        %1693 = vmatpush2.msra.mxu0 0.0
        %1694 = vmatprep.subr.mxu0 0.0
        %1695 = vmatpush2.msra.mxu0 0.0
        %1696 = vmatprep.subr.mxu0 0.0
        %1697 = vmatpush2.msra.mxu0 0.0
        %1698 = vmatprep.subr.mxu0 0.0
        %1699 = vmatpush2.msra.mxu0 0.0
        %1700 = vmatprep.subr.mxu0 0.0
        %1701 = vmatpush2.msra.mxu0 0.0
        %1702 = vmatprep.subr.mxu0 0.0
        %1703 = vmatpush2.msra.mxu0 0.0
        %1704 = vmatprep.subr.mxu0 0.0
        %1705 = vmatpush2.msra.mxu0 0.0
        %1706 = vmatprep.subr.mxu0 0.0
        %1707 = vmatpush2.msra.mxu0 0.0
        %1708 = vmatprep.subr.mxu0 0.0
        %1709 = vmatpush2.msra.mxu0 0.0
        %1710 = vmatprep.subr.mxu0 0.0
        %1711 = vmatpush2.msra.mxu0 0.0
        %1712 = vmatprep.subr.mxu0 0.0
        %1713 = vmatpush2.msra.mxu0 0.0
        %1714 = vmatprep.subr.mxu0 0.0
        %1715 = vmatpush2.msra.mxu0 0.0
        %1716 = vmatprep.mubr.f32.mxu0 0.0
        %1717 = vmatmul.mubr.f32.gmra.mxu0 %v1650
        %v1718 = vpop.f32.mrf.mxu0
        %v1719 = vadd.f32 %v1646, %v1718
        %v1720 = vpop.f32.mrf.mxu0
        %1721 = vdwg.mxu0
        %s1722 = scalar_lea.vmem %s457, 8 [#allocation15]
        %1723 = vst.msk [vmem:[%s1722] sm:$0xff] %vm519, %v1719
        %1724 = vxpose.xlu0.b32.start [1/16] %v1501, 128
        %1725 = vxpose.xlu0.b32.cont [2/16] 0.0, 128
        %1726 = vxpose.xlu0.b32.cont [3/16] 0.0, 128
        %1727 = vxpose.xlu0.b32.cont [4/16] 0.0, 128
        %1728 = vxpose.xlu0.b32.cont [5/16] 0.0, 128
        %1729 = vxpose.xlu0.b32.cont [6/16] 0.0, 128
        %1730 = vxpose.xlu0.b32.cont [7/16] 0.0, 128
        %1731 = vxpose.xlu0.b32.cont [8/16] 0.0, 128
        %1732 = vxpose.xlu0.b32.cont [9/16] 0.0, 128
        %1733 = vxpose.xlu0.b32.cont [10/16] 0.0, 128
        %1734 = vxpose.xlu0.b32.cont [11/16] 0.0, 128
        %1735 = vxpose.xlu0.b32.cont [12/16] 0.0, 128
        %1736 = vxpose.xlu0.b32.cont [13/16] 0.0, 128
        %1737 = vxpose.xlu0.b32.cont [14/16] 0.0, 128
        %1738 = vxpose.xlu0.b32.cont [15/16] 0.0, 128
        %1739 = vxpose.xlu0.b32.end [16/16] 0.0, 128
        %v1740 = vpop.trf.xlu0
        %v1741 = vpop.trf.xlu0
        %v1742 = vpop.trf.xlu0
        %v1743 = vpop.trf.xlu0
        %v1744 = vpop.trf.xlu0
        %v1745 = vpop.trf.xlu0
        %v1746 = vpop.trf.xlu0
        %v1747 = vpop.trf.xlu0
        %v1748 = vpop.trf.xlu0
        %v1749 = vpop.trf.xlu0
        %v1750 = vpop.trf.xlu0
        %v1751 = vpop.trf.xlu0
        %v1752 = vpop.trf.xlu0
        %v1753 = vpop.trf.xlu0
        %v1754 = vpop.trf.xlu0
        %v1755 = vpop.trf.xlu0
        %v1757 = vsel %vm678, %v1740, 0
        %v1760 = vsel %vm678, %v1741, 0
        %v1763 = vsel %vm678, %v1742, 0
        %v1766 = vsel %vm678, %v1743, 0
        %1768 = vmatprep.subr.mxu0 0.0
        %1769 = vmatpush1.msra.mxu0 0.0
        %1770 = vmatprep.subr.mxu0 0.0
        %1771 = vmatpush1.msra.mxu0 0.0
        %1772 = vmatprep.subr.mxu0 0.0
        %1773 = vmatpush1.msra.mxu0 0.0
        %1774 = vmatprep.subr.mxu0 0.0
        %1775 = vmatpush1.msra.mxu0 0.0
        %1776 = vmatprep.subr.mxu0 0.0
        %1777 = vmatpush1.msra.mxu0 0.0
        %1778 = vmatprep.subr.mxu0 0.0
        %1779 = vmatpush1.msra.mxu0 0.0
        %1780 = vmatprep.subr.mxu0 0.0
        %1781 = vmatpush1.msra.mxu0 0.0
        %1782 = vmatprep.subr.mxu0 0.0
        %1783 = vmatpush1.msra.mxu0 0.0
        %1784 = vmatprep.subr.mxu0 0.0
        %1785 = vmatpush1.msra.mxu0 0.0
        %1786 = vmatprep.subr.mxu0 0.0
        %1787 = vmatpush1.msra.mxu0 0.0
        %1788 = vmatprep.subr.mxu0 0.0
        %1789 = vmatpush1.msra.mxu0 0.0
        %1790 = vmatprep.subr.mxu0 0.0
        %1791 = vmatpush1.msra.mxu0 0.0
        %1792 = vmatprep.subr.mxu0 0.0
        %1793 = vmatpush1.msra.mxu0 0.0
        %1794 = vmatprep.subr.mxu0 0.0
        %1795 = vmatpush1.msra.mxu0 0.0
        %1796 = vmatprep.subr.mxu0 0.0
        %1797 = vmatpush1.msra.mxu0 0.0
        %1798 = vmatprep.subr.mxu0 0.0
        %1799 = vmatpush1.msra.mxu0 %v1575
        %1800 = vmatprep.subr.mxu0 0.0
        %1801 = vmatpush2.msra.mxu0 0.0
        %1802 = vmatprep.subr.mxu0 0.0
        %1803 = vmatpush2.msra.mxu0 0.0
        %1804 = vmatprep.subr.mxu0 0.0
        %1805 = vmatpush2.msra.mxu0 0.0
        %1806 = vmatprep.subr.mxu0 0.0
        %1807 = vmatpush2.msra.mxu0 0.0
        %1808 = vmatprep.subr.mxu0 0.0
        %1809 = vmatpush2.msra.mxu0 0.0
        %1810 = vmatprep.subr.mxu0 0.0
        %1811 = vmatpush2.msra.mxu0 0.0
        %1812 = vmatprep.subr.mxu0 0.0
        %1813 = vmatpush2.msra.mxu0 0.0
        %1814 = vmatprep.subr.mxu0 0.0
        %1815 = vmatpush2.msra.mxu0 0.0
        %1816 = vmatprep.subr.mxu0 0.0
        %1817 = vmatpush2.msra.mxu0 0.0
        %1818 = vmatprep.subr.mxu0 0.0
        %1819 = vmatpush2.msra.mxu0 0.0
        %1820 = vmatprep.subr.mxu0 0.0
        %1821 = vmatpush2.msra.mxu0 0.0
        %1822 = vmatprep.subr.mxu0 0.0
        %1823 = vmatpush2.msra.mxu0 0.0
        %1824 = vmatprep.subr.mxu0 0.0
        %1825 = vmatpush2.msra.mxu0 0.0
        %1826 = vmatprep.subr.mxu0 0.0
        %1827 = vmatpush2.msra.mxu0 0.0
        %1828 = vmatprep.subr.mxu0 0.0
        %1829 = vmatpush2.msra.mxu0 0.0
        %1830 = vmatprep.subr.mxu0 0.0
        %1831 = vmatpush2.msra.mxu0 0.0
        %1832 = vmatprep.mubr.f32.mxu0 0.0
        %1833 = vmatmul.mubr.f32.gmra.mxu0 %v1757
        %v1834 = vpop.f32.mrf.mxu0
        %v1835 = vadd.f32 0.0, %v1834
        %v1836 = vpop.f32.mrf.mxu0
        %1837 = vmatprep.mubr.f32.mxu0 0.0
        %1838 = vmatmul.mubr.f32.gmra.mxu0 %v1760
        %v1839 = vpop.f32.mrf.mxu0
        %v1840 = vadd.f32 0.0, %v1839
        %v1841 = vpop.f32.mrf.mxu0
        %1842 = vmatprep.mubr.f32.mxu0 0.0
        %1843 = vmatmul.mubr.f32.gmra.mxu0 %v1763
        %v1844 = vpop.f32.mrf.mxu0
        %v1845 = vadd.f32 0.0, %v1844
        %v1846 = vpop.f32.mrf.mxu0
        %1847 = vmatprep.mubr.f32.mxu0 0.0
        %1848 = vmatmul.mubr.f32.gmra.mxu0 %v1766
        %v1849 = vpop.f32.mrf.mxu0
        %v1850 = vadd.f32 0.0, %v1849
        %v1851 = vpop.f32.mrf.mxu0
        %1852 = vdwg.mxu0
        %v1853 = vadd.f32 %v1484, %v1835
        %v1854 = vadd.f32 %v1485, %v1840
        %v1855 = vadd.f32 %v1486, %v1845
        %v1856 = vadd.f32 %v1487, %v1850
        %1857 = vst.msk [vmem:[#allocation2] sm:$0xff] %vm519, %v1853
        %1858 = vst.msk [vmem:[#allocation2 + $0x8] sm:$0xff] %vm519, %v1854
        %1859 = vst.msk [vmem:[#allocation2 + $0x10] sm:$0xff] %vm519, %v1855
        %1860 = vst.msk [vmem:[#allocation2 + $0x18] sm:$0xff] %vm519, %v1856
        // Predicated region
        $region65: #{_delta_rule_pallas.1} parent=39 // pred_check
          %p1861 = pneg %p470
        $region66: #{_delta_rule_pallas.1} parent=39 // pred_check_branch
          %1863 = sbr.rel (%p1861) target = $region68
        $region67: #{_delta_rule_pallas.1} parent=39 // pred_region
          %v1864 = vld [vmem:[#allocation2] sm:$0xff]
          %v1865 = vld [vmem:[#allocation2 + $0x8] sm:$0xff]
          %v1866 = vld [vmem:[#allocation2 + $0x10] sm:$0xff]
          %v1867 = vld [vmem:[#allocation2 + $0x18] sm:$0xff]
          %1868 = vst.msk [vmem:[%s464] sm:$0xff] %vm519, %v1864
          %1869 = vst.msk [vmem:[%s464 + $0x8] sm:$0xff] %vm519, %v1865
          %1870 = vst.msk [vmem:[%s464 + $0x10] sm:$0xff] %vm519, %v1866
          %1871 = vst.msk [vmem:[%s464 + $0x18] sm:$0xff] %vm519, %v1867
        $region68: #{_delta_rule_pallas.1} parent=39 // pred_fallthru
          _
        %s1872 = sand.u32 %s193, 1
        %s1873 = scalar_lea.sflag [#allocation8], %s1872
        %s1874 = sand.u32 %s193, 1
        %s1875 = smul.addr %s1874, 16
        %s1876 = scalar_lea.vmem [#allocation15], %s1875
        %s1877 = sand.u32 %s219, 1
        %s1878 = scalar_lea.sflag [#allocation17], %s1877
        %s1879 = sand.u32 %s219, 1
        %s1880 = smul.addr %s1879, 32
        %s1881 = scalar_lea.vmem [#allocation16], %s1880
        // Predicated region
        $region69: #{_delta_rule_pallas.1} parent=39 // pred_check
          %p1882 = pneg %p203
        $region70: #{_delta_rule_pallas.1} parent=39 // pred_check_branch
          %1884 = sbr.rel (%p1882) target = $region72
        $region71: #{_delta_rule_pallas.1} parent=39 // pred_region
          %s1885 = smul.u32 2, %s38
          %s1887 = ssub.s32 256, 256
          %1888 = vsyncadd %s1873, %s1887
          %s1889 = smul.addr %s37, 2
          %s1890 = sadd.s32 %s1885, %s1889
          %s1891 = smul.addr %s1890, 128
          %s1892 = scalar_lea.hbm %s5, %s1891
          %s1893 = sshll.u32 %s1876, 4
          %s1894 = int_to_ptr.vmem [resolvable:$true] %s1893
          %1899 = dma.vmem_to_hbm [thread:$0]  %s1894, 256, %s1892, %s1873, 128, 128, 8
        $region72: #{_delta_rule_pallas.1} parent=39 // pred_fallthru
          _
        // Predicated region
        $region73: #{_delta_rule_pallas.1} parent=39 // pred_check
          %p1900 = pneg %p229
        $region74: #{_delta_rule_pallas.1} parent=39 // pred_check_branch
          %1902 = sbr.rel (%p1900) target = $region76
        $region75: #{_delta_rule_pallas.1} parent=39 // pred_region
          %s1904 = ssub.s32 512, 512
          %1905 = vsyncadd %s1878, %s1904
          %s1906 = smul.addr %s37, 4
          %s1907 = smul.addr %s1906, 128
          %s1908 = scalar_lea.hbm %s6, %s1907
          %s1909 = sshll.u32 %s1881, 4
          %s1910 = int_to_ptr.vmem [resolvable:$true] %s1909
          %1915 = dma.vmem_to_hbm [thread:$0]  %s1910, 512, %s1908, %s1878, 128, 128, 8
        $region76: #{_delta_rule_pallas.1} parent=39 // pred_fallthru
          _
      $region40: #{_delta_rule_pallas.1} parent=5 // pred_fallthru
        _
      %p1916 = scmp.le.s32.totalorder 2, %s28
      // Predicated region
      $region77: #{_delta_rule_pallas.1} parent=5 // pred_check
        %p1917 = pneg %p1916
      $region78: #{_delta_rule_pallas.1} parent=5 // pred_check_branch
        %1919 = sbr.rel (%p1917) target = $region80
      $region79: #{_delta_rule_pallas.1} parent=5 // pred_region
        %s1920 = ssub.s32 %s28, 2
        // Predicated region
        $region81: #{_delta_rule_pallas.1} parent=79 // pred_check
          %p1921 = pneg %p209
        $region82: #{_delta_rule_pallas.1} parent=79 // pred_check_branch
          %1923 = sbr.rel (%p1921) target = $region84
        $region83: #{_delta_rule_pallas.1} parent=79 // pred_region
          %s1924 = sand.u32 %s194, 1
          %s1925 = scalar_lea.sflag [#allocation8], %s1924
          %s1926 = sand.u32 %s194, 1
          %s1927 = smul.addr %s1926, 16
          %s1928 = scalar_lea.vmem [#allocation15], %s1927
          %1929 = dma.done %s1925, 256
        $region84: #{_delta_rule_pallas.1} parent=79 // pred_fallthru
          _
        // Predicated region
        $region85: #{_delta_rule_pallas.1} parent=79 // pred_check
          %p1930 = pneg %p235
        $region86: #{_delta_rule_pallas.1} parent=79 // pred_check_branch
          %1932 = sbr.rel (%p1930) target = $region88
        $region87: #{_delta_rule_pallas.1} parent=79 // pred_region
          %s1933 = sand.u32 %s220, 1
          %s1934 = scalar_lea.sflag [#allocation17], %s1933
          %s1935 = sand.u32 %s220, 1
          %s1936 = smul.addr %s1935, 32
          %s1937 = scalar_lea.vmem [#allocation16], %s1936
          %1938 = dma.done %s1934, 512
        $region88: #{_delta_rule_pallas.1} parent=79 // pred_fallthru
          _
      $region80: #{_delta_rule_pallas.1} parent=5 // pred_fallthru
        _
    $region6: #{_delta_rule_pallas.1} parent=1 // loop_footer
      %s32 = sadd.s32 1, %s28
    $region7: #{_delta_rule_pallas.1} parent=1 // loop_footer_branch
      %27 = sbr.rel target = $region3
    $region8: #{_delta_rule_pallas.1} parent=1 // loop_exit
      _
    %1939 = vsyncpa [#allocation7], 1
    %s1940 = scalar_lea.sflag [#allocation7], 1
    %1941 = vsyncpa %s1940, 1
    %1942 = vsyncpa [#allocation10], 1
    %s1943 = scalar_lea.sflag [#allocation10], 1
    %1944 = vsyncpa %s1943, 1
    %1945 = vsyncpa [#allocation13], 1
    %s1946 = scalar_lea.sflag [#allocation13], 1
    %1947 = vsyncpa %s1946, 1
    %1948 = vsyncpa [#allocation8], 1
    %s1949 = scalar_lea.sflag [#allocation8], 1
    %1950 = vsyncpa %s1949, 1
    %1951 = vsyncpa [#allocation17], 1
    %s1952 = scalar_lea.sflag [#allocation17], 1
    %1953 = vsyncpa %s1952, 1

</llo_original>
